<compile_context>
chip_gen: v6e
topology: v6e:2x2x1
jax: 0.10.0
libtpu: 0.0.40
codegen_flags: <defaults>
</compile_context>

<pallas_src>
import functools

import jax
import jax.numpy as jnp
import numpy as np
from jax.experimental import pallas as pl
from jax.experimental.pallas import tpu as pltpu


def _round_up(a, b):
    return (a + b - 1) // b * b


def _gelu_new(x):
    # GPT-NeoX ACT2FN["gelu_new"] (tanh approximation), computed in f32.
    return 0.5 * x * (1.0 + jnp.tanh(0.7978845608028654 * (x + 0.044715 * x * x * x)))


def _sparse_mlp_kernel(x_ref, wfc_t_ref, bfc_ref, wproj_t_ref, bproj_ref,
                       out_ref, idx_ref, act_ref, *, k, cm):
    tm = x_ref.shape[0]
    f = wfc_t_ref.shape[1]
    n_chunks = tm // cm

    def chunk_body(c, carry):
        r0 = pl.multiple_of(c * cm, cm)
        rows = pl.ds(r0, cm)

        # c_fc: bf16 x bf16 MXU matmul, f32 accumulation; bias + gelu_new in f32.
        x = x_ref[rows, :]                                           # (cm, D)
        pre = jnp.dot(x, wfc_t_ref[...],
                      preferred_element_type=jnp.float32) + bfc_ref[...]
        work = _gelu_new(pre)                                        # (cm, F) f32

        col = jax.lax.broadcasted_iota(jnp.int32, (cm, f), 1)        # lane index over F
        sparse = jnp.zeros((cm, f), jnp.float32)                     # sparse-decode input

        # Iterative top-k (k small & static).  Exactly k entries are selected; ties
        # break toward the smaller index.  Selected values are scattered straight into
        # `sparse`, and each step's (cm, 1) value / index column is stored directly to
        # the output refs at static lane j (no lane-padded slabs, no where-chains over
        # them).  Live working set: work + sparse + col = 3 x (cm, F).
        for j in range(k):
            m = jnp.max(work, axis=-1, keepdims=True)                              # (cm, 1)
            idx = jnp.min(jnp.where(work == m, col, f), axis=-1, keepdims=True)    # (cm, 1)
            hit = col == idx
            sparse = jnp.where(hit, m, sparse)
            work = jnp.where(hit, -jnp.inf, work)
            act_ref[rows, pl.ds(j, 1)] = m
            idx_ref[rows, pl.ds(j, 1)] = idx

        # Sparse decode (== decoder_impl): only the k selected activations contribute.
        y = jnp.dot(sparse.astype(wproj_t_ref.dtype), wproj_t_ref[...],
                    preferred_element_type=jnp.float32) + bproj_ref[...]
        out_ref[rows, :] = y.astype(out_ref.dtype)                   # dropout == identity (eval)
        return carry

    jax.lax.fori_loop(0, n_chunks, chunk_body, 0)


def _choose_tiles(n_tokens, f, tm_req):
    """Pick (token tile tm, inner chunk rows cm).

    cm: the top-k working set is 3 f32 arrays of (cm, F); keep it within ~48 of the 64
        physical vregs so the hot loop has no spill traffic.  Multiple of 16 so dynamic
        row offsets stay aligned for bf16 sublane packing.
    tm: multiple of cm; kept small enough that the grid has >= 4 steps when the token
        count allows (even split across v7x's 2 TensorCores, >= 2 steps/core for
        input/output double buffering).
    """
    cm = (48 * 1024) // (3 * max(f, 1))
    cm = max(16, min(256, (cm // 16) * 16))
    tm_req = max(cm, _round_up(tm_req, cm))
    if n_tokens >= 4 * cm:
        tm_cap = max(cm, ((n_tokens // 4) // cm) * cm)
        tm = min(tm_req, tm_cap)
    else:
        tm = max(cm, _round_up(min(tm_req, max(n_tokens, 1)), cm))
    return tm, cm


def sparse_mlp_forward(hidden_states, w_fc, b_fc, w_proj, b_proj, k, *,
                       tm=256, compute_dtype=jnp.bfloat16, out_dtype=None,
                       x_buffer_count=2):
    """hidden_states: [B, T, D].  w_fc: [F, D], b_fc: [F], w_proj: [D, F], b_proj: [D].

    Weights follow PyTorch nn.Linear convention [out_features, in_features]; the wrapper
    pre-transposes them (and casts to compute_dtype) so the kernel sees W_fc^T: [D, F]
    and W_proj^T: [F, D].  Pass compute_dtype=jnp.float32 for exact f32 parity with the
    PyTorch module; pass out_dtype=jnp.bfloat16 if the consumer accepts bf16 hidden
    states (halves the dense output writeback); pass x_buffer_count=3 on v5e to hide
    DMA latency behind the short per-tile compute.
    """
    B, T, D = hidden_states.shape
    F = w_fc.shape[0]
    N = B * T
    assert 1 <= k <= F
    out_dtype = hidden_states.dtype if out_dtype is None else out_dtype

    tm, cm = _choose_tiles(N, F, tm)
    n_pad = _round_up(N, tm)

    # Cast x to compute_dtype host-side: halves the x HBM read (bf16) and removes the
    # per-tile in-kernel cast.  Numerically identical to casting inside the kernel.
    xf = hidden_states.reshape(N, D).astype(compute_dtype)
    if n_pad != N:
        xf = jnp.pad(xf, ((0, n_pad - N), (0, 0)))

    wfc_t = w_fc.T.astype(compute_dtype)                    # (D, F)
    wproj_t = w_proj.T.astype(compute_dtype)                # (F, D)
    bfc2 = b_fc.reshape(1, F).astype(jnp.float32)
    bproj2 = b_proj.reshape(1, D).astype(jnp.float32)

    kernel = functools.partial(_sparse_mlp_kernel, k=k, cm=cm)

    # Generation-aware VMEM budget.  Resident weights are still double-buffered by the
    # pipeline even with constant index maps; chunk intermediates get spill headroom.
    w_bytes = jnp.dtype(compute_dtype).itemsize
    o_bytes = jnp.dtype(out_dtype).itemsize
    x_bufs = max(2, int(x_buffer_count))
    est = int(2 * 2 * D * F * w_bytes            # W_fc^T + W_proj^T, 2 pipeline buffers each
              + x_bufs * tm * D * w_bytes        # x tile(s)
              + 2 * tm * D * o_bytes             # out tile, double-buffered
              + 2 * 2 * tm * k * 4               # idx + act tiles, double-buffered
              + 2 * 2 * (F + D) * 4              # biases
              + 4 * 3 * cm * F * 4)              # live (cm, F) chunk working set + headroom
    try:
        vmem_cap = int(pltpu.get_tpu_info().vmem_capacity_bytes)
    except Exception:
        vmem_cap = 128 * 1024 * 1024             # v5e/v6e physical; conservative fallback
    cap = int(0.75 * vmem_cap)                   # ~48 MiB on v7x (64 MiB/TC), ~96 MiB on v5e/v6e
    if est > cap:
        raise ValueError(
            f"SparseMLP kernel footprint {est/2**20:.1f} MiB exceeds {cap/2**20:.1f} MiB "
            f"VMEM budget; reduce tm (got {tm}) or split F (got {F}) across grid steps.")
    vmem_limit = int(min(max(2 * est, 32 * 1024 * 1024), cap))

    if x_bufs > 2:
        x_spec = pl.BlockSpec((tm, D), lambda i: (i, 0), pipeline_mode=pl.Buffered(x_bufs))
    else:
        x_spec = pl.BlockSpec((tm, D), lambda i: (i, 0))

    out, idx, acts = pl.pallas_call(
        kernel,
        out_shape=(
            jax.ShapeDtypeStruct((n_pad, D), out_dtype),
            jax.ShapeDtypeStruct((n_pad, k), jnp.int32),
            jax.ShapeDtypeStruct((n_pad, k), jnp.float32),
        ),
        grid_spec=pltpu.PrefetchScalarGridSpec(
            num_scalar_prefetch=0,
            grid=(n_pad // tm,),
            in_specs=[
                x_spec,                                      # x tile (pipelined)
                pl.BlockSpec((D, F), lambda i: (0, 0)),      # W_fc^T (resident)
                pl.BlockSpec((1, F), lambda i: (0, 0)),      # b_fc
                pl.BlockSpec((F, D), lambda i: (0, 0)),      # W_proj^T (resident)
                pl.BlockSpec((1, D), lambda i: (0, 0)),      # b_proj
            ],
            out_specs=[
                pl.BlockSpec((tm, D), lambda i: (i, 0)),
                pl.BlockSpec((tm, k), lambda i: (i, 0)),
                pl.BlockSpec((tm, k), lambda i: (i, 0)),
            ],
        ),
        compiler_params=pltpu.CompilerParams(
            dimension_semantics=("parallel",),
            vmem_limit_bytes=vmem_limit),
    )(xf, wfc_t, bfc2, wproj_t, bproj2)

    return {
        'hidden_states': out[:N].reshape(B, T, D),
        'top_indices': idx[:N].reshape(B, T, k),
        'top_acts': acts[:N].reshape(B, T, k),
    }


def _reference(hidden_states, w_fc, b_fc, w_proj, b_proj, k, *, compute_dtype):
    """Pure-JAX reference mirroring the kernel's bf16-weight / f32-accumulate recipe.

    Note: the reference masks with `pre >= kth_value` (includes exact ties), while the
    kernel selects exactly k entries (ties break to the smaller index).  Identical under
    the no-ties assumption.
    """
    B, T, D = hidden_states.shape
    x = hidden_states.reshape(-1, D).astype(compute_dtype)
    pre = jnp.dot(x, w_fc.T.astype(compute_dtype),
                  preferred_element_type=jnp.float32) + b_fc
    h = _gelu_new(pre)                                           # (N, F) f32
    vals, inds = jax.lax.top_k(h, k)                             # sorted descending
    thresh = vals[..., -1:]
    sparse_h = jnp.where(h >= thresh, h, 0.0)
    y = jnp.dot(sparse_h.astype(compute_dtype), w_proj.T.astype(compute_dtype),
                preferred_element_type=jnp.float32) + b_proj
    return y, h, vals, inds


if __name__ == "__main__":
    # config: hidden_size=128, intermediate_size=32 -> F = 32*8 = 256, k=4.
    # N = B*T = 512 tokens -> tm=128 / cm=64 -> 4 grid steps, 2 chunks per tile.
    B, T, D = 2, 256, 128
    INTERMEDIATE = 32
    F = INTERMEDIATE * 8
    K = 4

    key = jax.random.PRNGKey(0)
    kx, k1, k2, k3, k4 = jax.random.split(key, 5)
    x = jax.random.normal(kx, (B, T, D), dtype=jnp.float32)
    w_fc = jax.random.normal(k1, (F, D), dtype=jnp.float32) * 0.05    # nn.Linear(D, F).weight
    b_fc = jax.random.normal(k2, (F,), dtype=jnp.float32) * 0.05
    w_proj = jax.random.normal(k3, (D, F), dtype=jnp.float32) * 0.05  # nn.Linear(F, D).weight
    b_proj = jax.random.normal(k4, (D,), dtype=jnp.float32) * 0.05

    out = sparse_mlp_forward(x, w_fc, b_fc, w_proj, b_proj, K)
    jax.block_until_ready(out)

    y_ref, h_ref, vals_ref, inds_ref = _reference(
        x, w_fc, b_fc, w_proj, b_proj, K, compute_dtype=jnp.bfloat16)

    got_y = np.asarray(out['hidden_states']).reshape(-1, D)
    got_idx = np.asarray(out['top_indices']).reshape(-1, K)
    got_act = np.asarray(out['top_acts']).reshape(-1, K)

    # 1) decoded hidden states
    np.testing.assert_allclose(got_y, np.asarray(y_ref), rtol=1e-4, atol=1e-4)

    # 2) the reported indices must point at the reported activations (index validity)
    h_ref_np = np.asarray(h_ref)
    gathered = np.take_along_axis(h_ref_np, got_idx, axis=-1)
    np.testing.assert_allclose(gathered, got_act, rtol=2e-5, atol=2e-5)

    # 3) the reported activations must be the top-k set (sorted compare; robust to
    #    near-tie ordering differences between the kernel and lax.top_k)
    np.testing.assert_allclose(np.sort(got_act, axis=-1),
                               np.sort(np.asarray(vals_ref), axis=-1),
                               rtol=2e-5, atol=2e-5)

    print("KERNEL_OK")
</pallas_src>

<mosaic_0001>
module attributes {stable_mosaic.version = 11 : i64} {
  func.func @_sparse_mlp_kernel(%arg0: i32, %arg1: memref<128x128xbf16, #tpu.memory_space<vmem>>, %arg2: memref<128x256xbf16, #tpu.memory_space<vmem>>, %arg3: memref<1x256xf32, #tpu.memory_space<vmem>>, %arg4: memref<256x128xbf16, #tpu.memory_space<vmem>>, %arg5: memref<1x128xf32, #tpu.memory_space<vmem>>, %arg6: memref<128x128xf32, #tpu.memory_space<vmem>>, %arg7: memref<128x4xi32, #tpu.memory_space<vmem>>, %arg8: memref<128x4xf32, #tpu.memory_space<vmem>>) attributes {dimension_semantics = [#tpu.dimension_semantics<parallel>], iteration_bounds = array<i64: 4>, scalar_prefetch = 0 : i64, scratch_operands = 0 : i64, tpu.core_type = #tpu.core_type<tc>, window_params = [{transform_indices = @transform_0, window_bounds = array<i64: 128, 128>}, {pipeline_mode = #tpu.pipeline_mode<synchronous>, transform_indices = @transform_1, window_bounds = array<i64: 128, 256>}, {pipeline_mode = #tpu.pipeline_mode<synchronous>, transform_indices = @transform_2, window_bounds = array<i64: 1, 256>}, {pipeline_mode = #tpu.pipeline_mode<synchronous>, transform_indices = @transform_3, window_bounds = array<i64: 256, 128>}, {pipeline_mode = #tpu.pipeline_mode<synchronous>, transform_indices = @transform_4, window_bounds = array<i64: 1, 128>}, {transform_indices = @transform_5, window_bounds = array<i64: 128, 128>}, {transform_indices = @transform_6, window_bounds = array<i64: 128, 4>}, {transform_indices = @transform_7, window_bounds = array<i64: 128, 4>}]} {
    %c0_i32 = arith.constant 0 : i32
    %c2_i32 = arith.constant 2 : i32
    %0 = arith.addi %c0_i32, %c2_i32 : i32
    %c1_i32 = arith.constant 1 : i32
    scf.for %arg9 = %c0_i32 to %0 step %c1_i32  : i32 {
      %c64_i32 = arith.constant 64 : i32
      %1 = arith.muli %arg9, %c64_i32 : i32
      %2 = tpu.assume_multiple %1, 64 : i32
      %3 = arith.index_cast %2 : i32 to index
      %c0 = arith.constant 0 : index
      %4 = vector.load %arg1[%3, %c0] : memref<128x128xbf16, #tpu.memory_space<vmem>>, vector<64x128xbf16>
      %c0_1 = arith.constant 0 : index
      %c0_2 = arith.constant 0 : index
      %5 = vector.load %arg2[%c0_1, %c0_2] : memref<128x256xbf16, #tpu.memory_space<vmem>>, vector<128x256xbf16>
      %cst = arith.constant dense<0.000000e+00> : vector<64x256xf32>
      %6 = tpu.matmul %4, %5, %cst {dimension_numbers = #tpu.dot_dimension_numbers<[1], [0], [0], [1], [0, 0, 1, 1], [], []>} : vector<64x128xbf16>, vector<128x256xbf16>, vector<64x256xf32> -> vector<64x256xf32>
      %c0_3 = arith.constant 0 : index
      %c0_4 = arith.constant 0 : index
      %7 = vector.load %arg3[%c0_3, %c0_4] : memref<1x256xf32, #tpu.memory_space<vmem>>, vector<1x256xf32>
      %8 = vector.broadcast %7 : vector<1x256xf32> to vector<64x256xf32>
      %9 = arith.addf %6, %8 : vector<64x256xf32>
      %cst_5 = arith.constant 5.000000e-01 : f32
      %10 = vector.broadcast %cst_5 : f32 to vector<64x256xf32>
      %11 = arith.mulf %10, %9 : vector<64x256xf32>
      %cst_6 = arith.constant 4.471500e-02 : f32
      %12 = vector.broadcast %cst_6 : f32 to vector<64x256xf32>
      %13 = arith.mulf %12, %9 : vector<64x256xf32>
      %14 = arith.mulf %13, %9 : vector<64x256xf32>
      %15 = arith.mulf %14, %9 : vector<64x256xf32>
      %16 = arith.addf %9, %15 : vector<64x256xf32>
      %cst_7 = arith.constant 0.797884583 : f32
      %17 = vector.broadcast %cst_7 : f32 to vector<64x256xf32>
      %18 = arith.mulf %17, %16 : vector<64x256xf32>
      %19 = math.tanh %18 : vector<64x256xf32>
      %cst_8 = arith.constant 1.000000e+00 : f32
      %20 = vector.broadcast %cst_8 : f32 to vector<64x256xf32>
      %21 = arith.addf %20, %19 : vector<64x256xf32>
      %22 = arith.mulf %11, %21 : vector<64x256xf32>
      %23 = tpu.iota {dimensions = array<i32: 1>} : vector<64x256xi32>
      %cst_9 = arith.constant 0.000000e+00 : f32
      %24 = vector.broadcast %cst_9 : f32 to vector<64x256xf32>
      %cst_10 = arith.constant dense<0xFF800000> : vector<64xf32>
      %25 = vector.multi_reduction <maximumf>, %22, %cst_10 [1] : vector<64x256xf32> to vector<64xf32>
      %26 = vector.shape_cast %25 : vector<64xf32> to vector<64x1xf32>
      %27 = vector.broadcast %26 : vector<64x1xf32> to vector<64x256xf32>
      %28 = arith.cmpf oeq, %22, %27 : vector<64x256xf32>
      %c256_i32 = arith.constant 256 : i32
      %29 = vector.broadcast %c256_i32 : i32 to vector<64x256xi32>
      %30 = arith.select %28, %23, %29 : vector<64x256xi1>, vector<64x256xi32>
      %cst_11 = arith.constant dense<2147483647> : vector<64xi32>
      %31 = vector.multi_reduction <minsi>, %30, %cst_11 [1] : vector<64x256xi32> to vector<64xi32>
      %32 = vector.shape_cast %31 : vector<64xi32> to vector<64x1xi32>
      %33 = vector.broadcast %32 : vector<64x1xi32> to vector<64x256xi32>
      %34 = arith.cmpi eq, %23, %33 : vector<64x256xi32>
      %35 = vector.shape_cast %26 : vector<64x1xf32> to vector<64x1xf32>
      %36 = vector.broadcast %35 : vector<64x1xf32> to vector<64x256xf32>
      %37 = arith.select %34, %36, %24 : vector<64x256xi1>, vector<64x256xf32>
      %cst_12 = arith.constant 0xFF800000 : f32
      %38 = vector.broadcast %cst_12 : f32 to vector<64x256xf32>
      %39 = arith.select %34, %38, %22 : vector<64x256xi1>, vector<64x256xf32>
      %40 = arith.index_cast %2 : i32 to index
      %c0_13 = arith.constant 0 : index
      %41 = vector.load %arg8[%40, %c0_13] : memref<128x4xf32, #tpu.memory_space<vmem>>, vector<64x1xf32>
      tpu.vector_store %arg8[%40, %c0_13], %26 {strides = array<i32>} : memref<128x4xf32, #tpu.memory_space<vmem>>, vector<64x1xf32>,
      %42 = arith.index_cast %2 : i32 to index
      %c0_14 = arith.constant 0 : index
      %43 = vector.load %arg7[%42, %c0_14] : memref<128x4xi32, #tpu.memory_space<vmem>>, vector<64x1xi32>
      tpu.vector_store %arg7[%42, %c0_14], %32 {strides = array<i32>} : memref<128x4xi32, #tpu.memory_space<vmem>>, vector<64x1xi32>,
      %cst_15 = arith.constant dense<0xFF800000> : vector<64xf32>
      %44 = vector.multi_reduction <maximumf>, %39, %cst_15 [1] : vector<64x256xf32> to vector<64xf32>
      %45 = vector.shape_cast %44 : vector<64xf32> to vector<64x1xf32>
      %46 = vector.broadcast %45 : vector<64x1xf32> to vector<64x256xf32>
      %47 = arith.cmpf oeq, %39, %46 : vector<64x256xf32>
      %c256_i32_16 = arith.constant 256 : i32
      %48 = vector.broadcast %c256_i32_16 : i32 to vector<64x256xi32>
      %49 = arith.select %47, %23, %48 : vector<64x256xi1>, vector<64x256xi32>
      %cst_17 = arith.constant dense<2147483647> : vector<64xi32>
      %50 = vector.multi_reduction <minsi>, %49, %cst_17 [1] : vector<64x256xi32> to vector<64xi32>
      %51 = vector.shape_cast %50 : vector<64xi32> to vector<64x1xi32>
      %52 = vector.broadcast %51 : vector<64x1xi32> to vector<64x256xi32>
      %53 = arith.cmpi eq, %23, %52 : vector<64x256xi32>
      %54 = vector.shape_cast %45 : vector<64x1xf32> to vector<64x1xf32>
      %55 = vector.broadcast %54 : vector<64x1xf32> to vector<64x256xf32>
      %56 = arith.select %53, %55, %37 : vector<64x256xi1>, vector<64x256xf32>
      %cst_18 = arith.constant 0xFF800000 : f32
      %57 = vector.broadcast %cst_18 : f32 to vector<64x256xf32>
      %58 = arith.select %53, %57, %39 : vector<64x256xi1>, vector<64x256xf32>
      %59 = arith.index_cast %2 : i32 to index
      %c1 = arith.constant 1 : index
      %60 = vector.load %arg8[%59, %c1] : memref<128x4xf32, #tpu.memory_space<vmem>>, vector<64x1xf32>
      tpu.vector_store %arg8[%59, %c1], %45 {strides = array<i32>} : memref<128x4xf32, #tpu.memory_space<vmem>>, vector<64x1xf32>,
      %61 = arith.index_cast %2 : i32 to index
      %c1_19 = arith.constant 1 : index
      %62 = vector.load %arg7[%61, %c1_19] : memref<128x4xi32, #tpu.memory_space<vmem>>, vector<64x1xi32>
      tpu.vector_store %arg7[%61, %c1_19], %51 {strides = array<i32>} : memref<128x4xi32, #tpu.memory_space<vmem>>, vector<64x1xi32>,
      %cst_20 = arith.constant dense<0xFF800000> : vector<64xf32>
      %63 = vector.multi_reduction <maximumf>, %58, %cst_20 [1] : vector<64x256xf32> to vector<64xf32>
      %64 = vector.shape_cast %63 : vector<64xf32> to vector<64x1xf32>
      %65 = vector.broadcast %64 : vector<64x1xf32> to vector<64x256xf32>
      %66 = arith.cmpf oeq, %58, %65 : vector<64x256xf32>
      %c256_i32_21 = arith.constant 256 : i32
      %67 = vector.broadcast %c256_i32_21 : i32 to vector<64x256xi32>
      %68 = arith.select %66, %23, %67 : vector<64x256xi1>, vector<64x256xi32>
      %cst_22 = arith.constant dense<2147483647> : vector<64xi32>
      %69 = vector.multi_reduction <minsi>, %68, %cst_22 [1] : vector<64x256xi32> to vector<64xi32>
      %70 = vector.shape_cast %69 : vector<64xi32> to vector<64x1xi32>
      %71 = vector.broadcast %70 : vector<64x1xi32> to vector<64x256xi32>
      %72 = arith.cmpi eq, %23, %71 : vector<64x256xi32>
      %73 = vector.shape_cast %64 : vector<64x1xf32> to vector<64x1xf32>
      %74 = vector.broadcast %73 : vector<64x1xf32> to vector<64x256xf32>
      %75 = arith.select %72, %74, %56 : vector<64x256xi1>, vector<64x256xf32>
      %cst_23 = arith.constant 0xFF800000 : f32
      %76 = vector.broadcast %cst_23 : f32 to vector<64x256xf32>
      %77 = arith.select %72, %76, %58 : vector<64x256xi1>, vector<64x256xf32>
      %78 = arith.index_cast %2 : i32 to index
      %c2 = arith.constant 2 : index
      %79 = vector.load %arg8[%78, %c2] : memref<128x4xf32, #tpu.memory_space<vmem>>, vector<64x1xf32>
      tpu.vector_store %arg8[%78, %c2], %64 {strides = array<i32>} : memref<128x4xf32, #tpu.memory_space<vmem>>, vector<64x1xf32>,
      %80 = arith.index_cast %2 : i32 to index
      %c2_24 = arith.constant 2 : index
      %81 = vector.load %arg7[%80, %c2_24] : memref<128x4xi32, #tpu.memory_space<vmem>>, vector<64x1xi32>
      tpu.vector_store %arg7[%80, %c2_24], %70 {strides = array<i32>} : memref<128x4xi32, #tpu.memory_space<vmem>>, vector<64x1xi32>,
      %cst_25 = arith.constant dense<0xFF800000> : vector<64xf32>
      %82 = vector.multi_reduction <maximumf>, %77, %cst_25 [1] : vector<64x256xf32> to vector<64xf32>
      %83 = vector.shape_cast %82 : vector<64xf32> to vector<64x1xf32>
      %84 = vector.broadcast %83 : vector<64x1xf32> to vector<64x256xf32>
      %85 = arith.cmpf oeq, %77, %84 : vector<64x256xf32>
      %c256_i32_26 = arith.constant 256 : i32
      %86 = vector.broadcast %c256_i32_26 : i32 to vector<64x256xi32>
      %87 = arith.select %85, %23, %86 : vector<64x256xi1>, vector<64x256xi32>
      %cst_27 = arith.constant dense<2147483647> : vector<64xi32>
      %88 = vector.multi_reduction <minsi>, %87, %cst_27 [1] : vector<64x256xi32> to vector<64xi32>
      %89 = vector.shape_cast %88 : vector<64xi32> to vector<64x1xi32>
      %90 = vector.broadcast %89 : vector<64x1xi32> to vector<64x256xi32>
      %91 = arith.cmpi eq, %23, %90 : vector<64x256xi32>
      %92 = vector.shape_cast %83 : vector<64x1xf32> to vector<64x1xf32>
      %93 = vector.broadcast %92 : vector<64x1xf32> to vector<64x256xf32>
      %94 = arith.select %91, %93, %75 : vector<64x256xi1>, vector<64x256xf32>
      %95 = arith.index_cast %2 : i32 to index
      %c3 = arith.constant 3 : index
      %96 = vector.load %arg8[%95, %c3] : memref<128x4xf32, #tpu.memory_space<vmem>>, vector<64x1xf32>
      tpu.vector_store %arg8[%95, %c3], %83 {strides = array<i32>} : memref<128x4xf32, #tpu.memory_space<vmem>>, vector<64x1xf32>,
      %97 = arith.index_cast %2 : i32 to index
      %c3_28 = arith.constant 3 : index
      %98 = vector.load %arg7[%97, %c3_28] : memref<128x4xi32, #tpu.memory_space<vmem>>, vector<64x1xi32>
      tpu.vector_store %arg7[%97, %c3_28], %89 {strides = array<i32>} : memref<128x4xi32, #tpu.memory_space<vmem>>, vector<64x1xi32>,
      %99 = arith.truncf %94 : vector<64x256xf32> to vector<64x256xbf16>
      %c0_29 = arith.constant 0 : index
      %c0_30 = arith.constant 0 : index
      %100 = vector.load %arg4[%c0_29, %c0_30] : memref<256x128xbf16, #tpu.memory_space<vmem>>, vector<256x128xbf16>
      %cst_31 = arith.constant dense<0.000000e+00> : vector<64x128xf32>
      %101 = tpu.matmul %99, %100, %cst_31 {dimension_numbers = #tpu.dot_dimension_numbers<[1], [0], [0], [1], [0, 0, 1, 1], [], []>} : vector<64x256xbf16>, vector<256x128xbf16>, vector<64x128xf32> -> vector<64x128xf32>
      %c0_32 = arith.constant 0 : index
      %c0_33 = arith.constant 0 : index
      %102 = vector.load %arg5[%c0_32, %c0_33] : memref<1x128xf32, #tpu.memory_space<vmem>>, vector<1x128xf32>
      %103 = vector.broadcast %102 : vector<1x128xf32> to vector<64x128xf32>
      %104 = arith.addf %101, %103 : vector<64x128xf32>
      %105 = arith.index_cast %2 : i32 to index
      %c0_34 = arith.constant 0 : index
      %106 = vector.load %arg6[%105, %c0_34] : memref<128x128xf32, #tpu.memory_space<vmem>>, vector<64x128xf32>
      tpu.vector_store %arg6[%105, %c0_34], %104 {strides = array<i32>} : memref<128x128xf32, #tpu.memory_space<vmem>>, vector<64x128xf32>,
    }
    %c2_i32_0 = arith.constant 2 : i32
    return
  }
  func.func @transform_0(%arg0: i32) -> (i32, i32) {
    %c0_i32 = arith.constant 0 : i32
    %c0_i32_0 = arith.constant 0 : i32
    return %arg0, %c0_i32 : i32, i32
  }
  func.func @transform_1(%arg0: i32) -> (i32, i32) {
    %c0_i32 = arith.constant 0 : i32
    %c0_i32_0 = arith.constant 0 : i32
    %c0_i32_1 = arith.constant 0 : i32
    return %c0_i32, %c0_i32_0 : i32, i32
  }
  func.func @transform_2(%arg0: i32) -> (i32, i32) {
    %c0_i32 = arith.constant 0 : i32
    %c0_i32_0 = arith.constant 0 : i32
    %c0_i32_1 = arith.constant 0 : i32
    return %c0_i32, %c0_i32_0 : i32, i32
  }
  func.func @transform_3(%arg0: i32) -> (i32, i32) {
    %c0_i32 = arith.constant 0 : i32
    %c0_i32_0 = arith.constant 0 : i32
    %c0_i32_1 = arith.constant 0 : i32
    return %c0_i32, %c0_i32_0 : i32, i32
  }
  func.func @transform_4(%arg0: i32) -> (i32, i32) {
    %c0_i32 = arith.constant 0 : i32
    %c0_i32_0 = arith.constant 0 : i32
    %c0_i32_1 = arith.constant 0 : i32
    return %c0_i32, %c0_i32_0 : i32, i32
  }
  func.func @transform_5(%arg0: i32) -> (i32, i32) {
    %c0_i32 = arith.constant 0 : i32
    %c0_i32_0 = arith.constant 0 : i32
    return %arg0, %c0_i32 : i32, i32
  }
  func.func @transform_6(%arg0: i32) -> (i32, i32) {
    %c0_i32 = arith.constant 0 : i32
    %c0_i32_0 = arith.constant 0 : i32
    return %arg0, %c0_i32 : i32, i32
  }
  func.func @transform_7(%arg0: i32) -> (i32, i32) {
    %c0_i32 = arith.constant 0 : i32
    %c0_i32_0 = arith.constant 0 : i32
    return %arg0, %c0_i32 : i32, i32
  }
}

</mosaic_0001>

<llo_original>
// kernel: tpu_custom_call.1
$region0: #{tpu_custom_call.1}
  #allocation0 [shape = 'u32[]', space=smem, size = 0x4, offset = 0x4, fixed_abs, tag = 'smem constant byte address 0x4 - core index']
  #allocation1 [shape = 'u32[144,128]{1,0:T(1,128)}', space=vmem, size = 0x12000, scoped, tag = 'internal scratch']
  %s0 = inlined_call_operand.hbm [shape: bf16[512,128], index: 0, kind: input, shape index: {}]
  %s1 = inlined_call_operand.hbm [shape: bf16[128,256], index: 1, kind: input, shape index: {}]
  %s2 = inlined_call_operand.vmem [shape: f32[1,256], index: 2, kind: input, shape index: {}]
  %s3 = inlined_call_operand.hbm [shape: bf16[256,128], index: 3, kind: input, shape index: {}]
  %s4 = inlined_call_operand.vmem [shape: f32[1,128], index: 4, kind: input, shape index: {}]
  %s5 = inlined_call_operand.hbm [shape: f32[512,128], index: 5, kind: output, shape index: {0}]
  %s6 = inlined_call_operand.vmem [shape: s32[512,4], index: 6, kind: output, shape index: {1}]
  %s7 = inlined_call_operand.vmem [shape: f32[512,4], index: 7, kind: output, shape index: {2}]
  %8 = xla_tuple %s5, %s6, %s7
  %s9 = sld [smem:[#allocation0]]
  $region88: #{tpu_custom_call.1} parent=0
    _
  %s11 = ssub.s32 1, %s9
  %s12 = scalar_select 0, %s11, %s9
  $region1: #{tpu_custom_call.1} parent=0
    #allocation2 [shape = 'u8[65536]{0}', space=vmem, size = 0x10000, scoped, tag = 'input window, operand 0']
    #allocation3 [shape = 's32[2]{0}', space=sflag, size = 0x8, scoped, tag = 'scoped memory for tpu_custom_call.1']
    #allocation4 [shape = 's32[2]{0}', space=sflag, size = 0x8, scoped, tag = 'scoped memory for tpu_custom_call.1']
    #allocation5 [shape = 'u8[65536]{0}', space=vmem, size = 0x10000, scoped, tag = 'input window, operand 1, single buffered']
    #allocation6 [shape = 's32[1]{0}', space=sflag, size = 0x4, scoped, tag = 'scoped memory for tpu_custom_call.1']
    #allocation7 [shape = 'u8[65536]{0}', space=vmem, size = 0x10000, scoped, tag = 'input window, operand 3, single buffered']
    #allocation8 [shape = 'u8[131072]{0}', space=vmem, size = 0x20000, scoped, tag = 'output window, operand 0']
    %13 = vsyncpa [#allocation3], 0
    %s14 = scalar_lea.sflag [#allocation3], 1
    %15 = vsyncpa %s14, 0
    %16 = vsyncpa [#allocation6], 0
    %17 = vsyncpa [#allocation4], 0
    %s18 = scalar_lea.sflag [#allocation4], 1
    %19 = vsyncpa %s18, 0
    loop: start=0, step=1, limit=6
    $region2: #{tpu_custom_call.1} parent=1 // loop_pre_header
      _
    $region3: #{tpu_custom_call.1} parent=1 // loop_header
      %s21 = sphi 0, %s25
      %p22 = scmp.ge.s32.totalorder %s21, 6
      %s31 = sphi 0, %s33
      %s34 = sphi 0, %s31
      %s35 = sphi 0, %s34
      %s51 = sphi 0, %s35
      %s55 = sphi 0, %s55
      %s57 = sphi 0, %s55
      %s58 = sphi 0, %s57
      %s72 = sphi 0, %s58
      %s76 = sphi 0, %s76
      %s78 = sphi 0, %s76
      %s79 = sphi 0, %s78
      %s93 = sphi 0, %s79
      %s97 = sphi 0, %s97
      %s99 = sphi 0, %s97
      %s100 = sphi 0, %s99
      %s114 = sphi 0, %s100
      %s118 = sphi 0, %s118
      %s120 = sphi 0, %s118
      %s121 = sphi 0, %s120
      %s135 = sphi 0, %s121
      %s141 = sphi 0, %s143
      %s144 = sphi 0, %s141
      %s145 = sphi 0, %s144
      %s161 = sphi 0, %s145
      %s167 = sphi 0, %s169
      %s170 = sphi 0, %s167
      %s171 = sphi 0, %s170
      %s187 = sphi 0, %s171
      %s193 = sphi 0, %s195
      %s196 = sphi 0, %s193
      %s197 = sphi 0, %s196
      %s213 = sphi 0, %s197
    $region4: #{tpu_custom_call.1} parent=1 // loop_header_branch
      %24 = sbr.rel (%p22) target = $region8
    $region5: #{tpu_custom_call.1} parent=1 // loop_body
      %s26 = ssub.s32 %s21, 1
      %s27 = ssub.s32 %s21, 2
      %s28 = sadd.s32 %s21, 1
      %s29 = ssub.s32 %s21, %s28
      %p30 = scmp.eq.s32.totalorder %s29, 0
      %s32 = sadd.s32 %s31, 1
      %s33 = scalar_select %p30, %s31, %s32
      %p36 = pneg %p30
      %p37 = scmp.eq.s32.totalorder %s21, 3
      %p38 = por %p36, %p37
      %p39 = scmp.ne.s32.totalorder %s31, %s34
      %p40 = scmp.eq.s32.totalorder %s21, 0
      %p41 = por %p39, %p40
      %p42 = scmp.ne.s32.totalorder %s31, %s34
      %p43 = scmp.eq.s32.totalorder %s26, 3
      %p44 = por %p42, %p43
      %p45 = scmp.ne.s32.totalorder %s34, %s35
      %p46 = scmp.eq.s32.totalorder %s26, 0
      %p47 = por %p45, %p46
      %p48 = scmp.ne.s32.totalorder %s34, %s35
      %p49 = scmp.eq.s32.totalorder %s27, 3
      %p50 = por %p48, %p49
      %p52 = scmp.ne.s32.totalorder %s35, %s51
      %p53 = scmp.eq.s32.totalorder %s27, 0
      %p54 = por %p52, %p53
      %s56 = sadd.s32 %s55, 1
      %p59 = scmp.eq.s32.totalorder %s21, 3
      %p60 = scmp.ne.s32.totalorder %s55, %s57
      %p61 = scmp.eq.s32.totalorder %s21, 0
      %p62 = por %p60, %p61
      %p63 = scmp.ne.s32.totalorder %s55, %s57
      %p64 = scmp.eq.s32.totalorder %s26, 3
      %p65 = por %p63, %p64
      %p66 = scmp.ne.s32.totalorder %s57, %s58
      %p67 = scmp.eq.s32.totalorder %s26, 0
      %p68 = por %p66, %p67
      %p69 = scmp.ne.s32.totalorder %s57, %s58
      %p70 = scmp.eq.s32.totalorder %s27, 3
      %p71 = por %p69, %p70
      %p73 = scmp.ne.s32.totalorder %s58, %s72
      %p74 = scmp.eq.s32.totalorder %s27, 0
      %p75 = por %p73, %p74
      %s77 = sadd.s32 %s76, 1
      %p80 = scmp.eq.s32.totalorder %s21, 3
      %p81 = scmp.ne.s32.totalorder %s76, %s78
      %p82 = scmp.eq.s32.totalorder %s21, 0
      %p83 = por %p81, %p82
      %p84 = scmp.ne.s32.totalorder %s76, %s78
      %p85 = scmp.eq.s32.totalorder %s26, 3
      %p86 = por %p84, %p85
      %p87 = scmp.ne.s32.totalorder %s78, %s79
      %p88 = scmp.eq.s32.totalorder %s26, 0
      %p89 = por %p87, %p88
      %p90 = scmp.ne.s32.totalorder %s78, %s79
      %p91 = scmp.eq.s32.totalorder %s27, 3
      %p92 = por %p90, %p91
      %p94 = scmp.ne.s32.totalorder %s79, %s93
      %p95 = scmp.eq.s32.totalorder %s27, 0
      %p96 = por %p94, %p95
      %s98 = sadd.s32 %s97, 1
      %p101 = scmp.eq.s32.totalorder %s21, 3
      %p102 = scmp.ne.s32.totalorder %s97, %s99
      %p103 = scmp.eq.s32.totalorder %s21, 0
      %p104 = por %p102, %p103
      %p105 = scmp.ne.s32.totalorder %s97, %s99
      %p106 = scmp.eq.s32.totalorder %s26, 3
      %p107 = por %p105, %p106
      %p108 = scmp.ne.s32.totalorder %s99, %s100
      %p109 = scmp.eq.s32.totalorder %s26, 0
      %p110 = por %p108, %p109
      %p111 = scmp.ne.s32.totalorder %s99, %s100
      %p112 = scmp.eq.s32.totalorder %s27, 3
      %p113 = por %p111, %p112
      %p115 = scmp.ne.s32.totalorder %s100, %s114
      %p116 = scmp.eq.s32.totalorder %s27, 0
      %p117 = por %p115, %p116
      %s119 = sadd.s32 %s118, 1
      %p122 = scmp.eq.s32.totalorder %s21, 3
      %p123 = scmp.ne.s32.totalorder %s118, %s120
      %p124 = scmp.eq.s32.totalorder %s21, 0
      %p125 = por %p123, %p124
      %p126 = scmp.ne.s32.totalorder %s118, %s120
      %p127 = scmp.eq.s32.totalorder %s26, 3
      %p128 = por %p126, %p127
      %p129 = scmp.ne.s32.totalorder %s120, %s121
      %p130 = scmp.eq.s32.totalorder %s26, 0
      %p131 = por %p129, %p130
      %p132 = scmp.ne.s32.totalorder %s120, %s121
      %p133 = scmp.eq.s32.totalorder %s27, 3
      %p134 = por %p132, %p133
      %p136 = scmp.ne.s32.totalorder %s121, %s135
      %p137 = scmp.eq.s32.totalorder %s27, 0
      %p138 = por %p136, %p137
      %s139 = ssub.s32 %s21, %s28
      %p140 = scmp.eq.s32.totalorder %s139, 0
      %s142 = sadd.s32 %s141, 1
      %s143 = scalar_select %p140, %s141, %s142
      %p146 = pneg %p140
      %p147 = scmp.eq.s32.totalorder %s21, 3
      %p148 = por %p146, %p147
      %p149 = scmp.ne.s32.totalorder %s141, %s144
      %p150 = scmp.eq.s32.totalorder %s21, 0
      %p151 = por %p149, %p150
      %p152 = scmp.ne.s32.totalorder %s141, %s144
      %p153 = scmp.eq.s32.totalorder %s26, 3
      %p154 = por %p152, %p153
      %p155 = scmp.ne.s32.totalorder %s144, %s145
      %p156 = scmp.eq.s32.totalorder %s26, 0
      %p157 = por %p155, %p156
      %p158 = scmp.ne.s32.totalorder %s144, %s145
      %p159 = scmp.eq.s32.totalorder %s27, 3
      %p160 = por %p158, %p159
      %p162 = scmp.ne.s32.totalorder %s145, %s161
      %p163 = scmp.eq.s32.totalorder %s27, 0
      %p164 = por %p162, %p163
      %s165 = ssub.s32 %s21, %s28
      %p166 = scmp.eq.s32.totalorder %s165, 0
      %s168 = sadd.s32 %s167, 1
      %s169 = scalar_select %p166, %s167, %s168
      %p172 = pneg %p166
      %p173 = scmp.eq.s32.totalorder %s21, 3
      %p174 = por %p172, %p173
      %p175 = scmp.ne.s32.totalorder %s167, %s170
      %p176 = scmp.eq.s32.totalorder %s21, 0
      %p177 = por %p175, %p176
      %p178 = scmp.ne.s32.totalorder %s167, %s170
      %p179 = scmp.eq.s32.totalorder %s26, 3
      %p180 = por %p178, %p179
      %p181 = scmp.ne.s32.totalorder %s170, %s171
      %p182 = scmp.eq.s32.totalorder %s26, 0
      %p183 = por %p181, %p182
      %p184 = scmp.ne.s32.totalorder %s170, %s171
      %p185 = scmp.eq.s32.totalorder %s27, 3
      %p186 = por %p184, %p185
      %p188 = scmp.ne.s32.totalorder %s171, %s187
      %p189 = scmp.eq.s32.totalorder %s27, 0
      %p190 = por %p188, %p189
      %s191 = ssub.s32 %s21, %s28
      %p192 = scmp.eq.s32.totalorder %s191, 0
      %s194 = sadd.s32 %s193, 1
      %s195 = scalar_select %p192, %s193, %s194
      %p198 = pneg %p192
      %p199 = scmp.eq.s32.totalorder %s21, 3
      %p200 = por %p198, %p199
      %p201 = scmp.ne.s32.totalorder %s193, %s196
      %p202 = scmp.eq.s32.totalorder %s21, 0
      %p203 = por %p201, %p202
      %p204 = scmp.ne.s32.totalorder %s193, %s196
      %p205 = scmp.eq.s32.totalorder %s26, 3
      %p206 = por %p204, %p205
      %p207 = scmp.ne.s32.totalorder %s196, %s197
      %p208 = scmp.eq.s32.totalorder %s26, 0
      %p209 = por %p207, %p208
      %p210 = scmp.ne.s32.totalorder %s196, %s197
      %p211 = scmp.eq.s32.totalorder %s27, 3
      %p212 = por %p210, %p211
      %p214 = scmp.ne.s32.totalorder %s197, %s213
      %p215 = scmp.eq.s32.totalorder %s27, 0
      %p216 = por %p214, %p215
      %p217 = scmp.le.s32.totalorder 1, %s21
      %p218 = scmp.lt.s32.totalorder %s21, 5
      %p219 = pnand %p217, %p218
      %p220 = pneg %p219
      // Predicated region
      $region9: #{tpu_custom_call.1} parent=5 // pred_check
        _
      $region10: #{tpu_custom_call.1} parent=5 // pred_check_branch
        %222 = sbr.rel (%p219) target = $region12
      $region11: #{tpu_custom_call.1} parent=5 // pred_region
        %s223 = ssub.s32 %s21, 1
        // Predicated region
        $region13: #{tpu_custom_call.1} parent=11 // pred_check
          %p224 = pneg %p68
        $region14: #{tpu_custom_call.1} parent=11 // pred_check_branch
          %226 = sbr.rel (%p224) target = $region16
        $region15: #{tpu_custom_call.1} parent=11 // pred_region
          %s228 = ssub.s32 2048, 2048
          %229 = vsyncadd [#allocation6], %s228
          %s230 = sshll.u32 [#allocation5], 4
          %s231 = int_to_ptr.vmem [resolvable:$true] %s230
          %236 = dma.hbm_to_vmem [thread:$0]  %s1, 2048, %s231, [#allocation6], 128, 128, 8
        $region16: #{tpu_custom_call.1} parent=11 // pred_fallthru
          _
        // Predicated region
        $region17: #{tpu_custom_call.1} parent=11 // pred_check
          %p237 = pneg %p89
        $region18: #{tpu_custom_call.1} parent=11 // pred_check_branch
          %239 = sbr.rel (%p237) target = $region20
        $region19: #{tpu_custom_call.1} parent=11 // pred_region
          _
        $region20: #{tpu_custom_call.1} parent=11 // pred_fallthru
          _
        // Predicated region
        $region21: #{tpu_custom_call.1} parent=11 // pred_check
          %p240 = pneg %p110
        $region22: #{tpu_custom_call.1} parent=11 // pred_check_branch
          %242 = sbr.rel (%p240) target = $region24
        $region23: #{tpu_custom_call.1} parent=11 // pred_region
          %s244 = ssub.s32 2048, 2048
          %245 = vsyncadd [#allocation6], %s244
          %s246 = sshll.u32 [#allocation7], 4
          %s247 = int_to_ptr.vmem [resolvable:$true] %s246
          %252 = dma.hbm_to_vmem [thread:$0]  %s3, 2048, %s247, [#allocation6], 64, 64, 4
        $region24: #{tpu_custom_call.1} parent=11 // pred_fallthru
          _
        // Predicated region
        $region25: #{tpu_custom_call.1} parent=11 // pred_check
          %p253 = pneg %p131
        $region26: #{tpu_custom_call.1} parent=11 // pred_check_branch
          %255 = sbr.rel (%p253) target = $region28
        $region27: #{tpu_custom_call.1} parent=11 // pred_region
          _
        $region28: #{tpu_custom_call.1} parent=11 // pred_fallthru
          _
      $region12: #{tpu_custom_call.1} parent=5 // pred_fallthru
        _
      %p256 = scmp.lt.s32.totalorder %s21, 4
      // Predicated region
      $region29: #{tpu_custom_call.1} parent=5 // pred_check
        %p257 = pneg %p256
      $region30: #{tpu_custom_call.1} parent=5 // pred_check_branch
        %259 = sbr.rel (%p257) target = $region32
      $region31: #{tpu_custom_call.1} parent=5 // pred_region
        // Predicated region
        $region33: #{tpu_custom_call.1} parent=31 // pred_check
          %p260 = pneg %p41
        $region34: #{tpu_custom_call.1} parent=31 // pred_check_branch
          %262 = sbr.rel (%p260) target = $region36
        $region35: #{tpu_custom_call.1} parent=31 // pred_region
          %s263 = sand.u32 %s31, 1
          %s264 = scalar_lea.sflag [#allocation3], %s263
          %s265 = sand.u32 %s31, 1
          %s266 = smul.addr %s265, 64
          %s267 = scalar_lea.vmem [#allocation2], %s266
          %s268 = smul.u32 16, %s21
          %s270 = ssub.s32 1024, 1024
          %271 = vsyncadd %s264, %s270
          %s272 = smul.addr %s268, 64
          %s273 = scalar_lea.hbm %s0, %s272
          %s274 = sshll.u32 %s267, 4
          %s275 = int_to_ptr.vmem [resolvable:$true] %s274
          %280 = dma.hbm_to_vmem [thread:$0]  %s273, 1024, %s275, %s264, 64, 64, 4
        $region36: #{tpu_custom_call.1} parent=31 // pred_fallthru
          _
      $region32: #{tpu_custom_call.1} parent=5 // pred_fallthru
        _
      %p281 = scmp.le.s32.totalorder 1, %s21
      %p282 = scmp.lt.s32.totalorder %s21, 5
      %p283 = pnand %p281, %p282
      %p284 = pneg %p283
      // Predicated region
      $region37: #{tpu_custom_call.1} parent=5 // pred_check
        _
      $region38: #{tpu_custom_call.1} parent=5 // pred_check_branch
        %286 = sbr.rel (%p283) target = $region40
      $region39: #{tpu_custom_call.1} parent=5 // pred_region
        %s287 = ssub.s32 %s21, 1
        %s288 = sand.u32 %s34, 1
        %s289 = scalar_lea.sflag [#allocation3], %s288
        %s290 = sand.u32 %s34, 1
        %s291 = smul.addr %s290, 64
        %s292 = scalar_lea.vmem [#allocation2], %s291
        // Predicated region
        $region41: #{tpu_custom_call.1} parent=39 // pred_check
          %p293 = pneg %p47
        $region42: #{tpu_custom_call.1} parent=39 // pred_check_branch
          %295 = sbr.rel (%p293) target = $region44
        $region43: #{tpu_custom_call.1} parent=39 // pred_region
          %296 = dma.done %s289, 1024
        $region44: #{tpu_custom_call.1} parent=39 // pred_fallthru
          _
        // Predicated region
        $region45: #{tpu_custom_call.1} parent=39 // pred_check
          %p297 = pneg %p68
        $region46: #{tpu_custom_call.1} parent=39 // pred_check_branch
          %299 = sbr.rel (%p297) target = $region48
        $region47: #{tpu_custom_call.1} parent=39 // pred_region
          %300 = dma.done [#allocation6], 2048
        $region48: #{tpu_custom_call.1} parent=39 // pred_fallthru
          _
        // Predicated region
        $region49: #{tpu_custom_call.1} parent=39 // pred_check
          %p301 = pneg %p110
        $region50: #{tpu_custom_call.1} parent=39 // pred_check_branch
          %303 = sbr.rel (%p301) target = $region52
        $region51: #{tpu_custom_call.1} parent=39 // pred_region
          %304 = dma.done [#allocation6], 2048
        $region52: #{tpu_custom_call.1} parent=39 // pred_fallthru
          _
        %s305 = sand.u32 %s34, 1
        %s306 = scalar_lea.sflag [#allocation3], %s305
        %s307 = sand.u32 %s34, 1
        %s308 = smul.addr %s307, 64
        %s309 = scalar_lea.vmem [#allocation2], %s308
        %p310 = pneg %p47
        %p311 = pneg %p44
        %p312 = pneg %p68
        %p313 = pneg %p65
        %p314 = pneg %p89
        %p315 = pneg %p86
        %p316 = pneg %p110
        %p317 = pneg %p107
        %p318 = pneg %p131
        %p319 = pneg %p128
        %p320 = pneg %p157
        %p321 = pneg %p154
        %s322 = sand.u32 %s144, 1
        %s323 = scalar_lea.sflag [#allocation4], %s322
        %s324 = sand.u32 %s144, 1
        %s325 = smul.addr %s324, 128
        %s326 = scalar_lea.vmem [#allocation8], %s325
        %p327 = pneg %p183
        %p328 = pneg %p180
        %s329 = smul.u32 16, %s26
        %p330 = scmp.lt.s32.totalorder %s329, 63
        %s331 = scalar_select %p330, %s329, 63
        %s332 = smul.addr %s331, 8
        %s333 = scalar_lea.vmem %s6, %s332
        %p334 = pneg %p209
        %p335 = pneg %p206
        %s336 = smul.u32 16, %s26
        %p337 = scmp.lt.s32.totalorder %s336, 63
        %s338 = scalar_select %p337, %s336, 63
        %s339 = smul.addr %s338, 8
        %s340 = scalar_lea.vmem %s7, %s339
        %s341 = smul.u32 16, %s26
        %s342 = smul.u32 16, %s26
        %s343 = smul.u32 16, %s26
        %p344 = scmp.lt.s32.totalorder %s343, 63
        %s345 = scalar_select %p344, %s343, 63
        %s346 = smul.addr %s345, 8
        %s347 = scalar_lea.vmem %s6, %s346
        %s348 = smul.u32 16, %s26
        %s349 = smul.u32 16, %s26
        %p350 = scmp.lt.s32.totalorder %s349, 63
        %s351 = scalar_select %p350, %s349, 63
        %s352 = smul.addr %s351, 8
        %s353 = scalar_lea.vmem %s7, %s352
        %s354 = smul.u32 16, %s26
        loop: start=0, step=1, limit=2
        $region53: #{tpu_custom_call.1} parent=39 // loop_pre_header
          _
        $region54: #{tpu_custom_call.1} parent=39 // loop_header
          %s357 = sphi 0, %s361
          %p358 = scmp.ge.s32.totalorder %s357, 2
        $region55: #{tpu_custom_call.1} parent=39 // loop_header_branch
          %360 = sbr.rel (%p358) target = $region59
        $region56: #{tpu_custom_call.1} parent=39 // loop_body
          %s362 = smul.u32 %s357, 64
          %s363 = sshra.s32 %s362, 3
          %s364 = sand.u32 %s362, 7
          %s365 = smul.addr %s363, 4
          %s366 = scalar_lea.vmem %s292, %s365 [#allocation2]
          %v367 = vld [vmem:[%s366] sm:$0xf]
          %v368 = vld [vmem:[%s366 + $0x4] sm:$0xf]
          %v369 = vld [vmem:[%s366 + $0x8] sm:$0xf]
          %v370 = vld [vmem:[%s366 + $0xc] sm:$0xf]
          %v371 = vld [vmem:[%s366 + $0x10] sm:$0xf]
          %v372 = vld [vmem:[%s366 + $0x14] sm:$0xf]
          %v373 = vld [vmem:[%s366 + $0x18] sm:$0xf]
          %v374 = vld [vmem:[%s366 + $0x1c] sm:$0xf]
          %v375 = vld [vmem:[#allocation5] sm:$0xff]
          %v376 = vld [vmem:[#allocation5 + $0x8] sm:$0xff]
          %v377 = vld [vmem:[#allocation5 + $0x10] sm:$0xff]
          %v378 = vld [vmem:[#allocation5 + $0x18] sm:$0xff]
          %v379 = vld [vmem:[#allocation5 + $0x20] sm:$0xff]
          %v380 = vld [vmem:[#allocation5 + $0x28] sm:$0xff]
          %v381 = vld [vmem:[#allocation5 + $0x30] sm:$0xff]
          %v382 = vld [vmem:[#allocation5 + $0x38] sm:$0xff]
          %v383 = vld [vmem:[#allocation5 + $0x40] sm:$0xff]
          %v384 = vld [vmem:[#allocation5 + $0x48] sm:$0xff]
          %v385 = vld [vmem:[#allocation5 + $0x50] sm:$0xff]
          %v386 = vld [vmem:[#allocation5 + $0x58] sm:$0xff]
          %v387 = vld [vmem:[#allocation5 + $0x60] sm:$0xff]
          %v388 = vld [vmem:[#allocation5 + $0x68] sm:$0xff]
          %v389 = vld [vmem:[#allocation5 + $0x70] sm:$0xff]
          %v390 = vld [vmem:[#allocation5 + $0x78] sm:$0xff]
          %v391 = vld [vmem:[%s2] sm:$0x3]
          %v393 = vlaneseq
          %v394 = vshrl.u32 %v393, 7
          %v395 = vsub.s32 0, %v394
          %v396 = vrot.slane %v391, %v395
          %v397 = vlaneseq
          %v398 = vshrl.u32 %v397, 7
          %v399 = vsub.s32 1, %v398
          %v400 = vrot.slane %v391, %v399
          %v411 = vunpack.c.l.b16 %v367
          %v412 = vunpack.c.l.b16 %v368
          %v413 = vunpack.c.l.b16 %v369
          %v414 = vunpack.c.l.b16 %v370
          %v415 = vunpack.c.l.b16 %v371
          %v416 = vunpack.c.l.b16 %v372
          %v417 = vunpack.c.l.b16 %v373
          %v418 = vunpack.c.l.b16 %v374
          %v419 = vpack.c.b16 %v412, %v411
          %v420 = vpack.c.b16 %v414, %v413
          %v421 = vpack.c.b16 %v416, %v415
          %v422 = vpack.c.b16 %v418, %v417
          %v443 = vunpack.c.l.b16 %v375
          %v444 = vunpack.c.h.b16 %v375
          %v445 = vunpack.c.l.b16 %v376
          %v446 = vunpack.c.h.b16 %v376
          %v447 = vunpack.c.l.b16 %v377
          %v448 = vunpack.c.h.b16 %v377
          %v449 = vunpack.c.l.b16 %v378
          %v450 = vunpack.c.h.b16 %v378
          %v451 = vunpack.c.l.b16 %v379
          %v452 = vunpack.c.h.b16 %v379
          %v453 = vunpack.c.l.b16 %v380
          %v454 = vunpack.c.h.b16 %v380
          %v455 = vunpack.c.l.b16 %v381
          %v456 = vunpack.c.h.b16 %v381
          %v457 = vunpack.c.l.b16 %v382
          %v458 = vunpack.c.h.b16 %v382
          %v459 = vunpack.c.l.b16 %v383
          %v460 = vunpack.c.h.b16 %v383
          %v461 = vunpack.c.l.b16 %v384
          %v462 = vunpack.c.h.b16 %v384
          %v463 = vunpack.c.l.b16 %v385
          %v464 = vunpack.c.h.b16 %v385
          %v465 = vunpack.c.l.b16 %v386
          %v466 = vunpack.c.h.b16 %v386
          %v467 = vunpack.c.l.b16 %v387
          %v468 = vunpack.c.h.b16 %v387
          %v469 = vunpack.c.l.b16 %v388
          %v470 = vunpack.c.h.b16 %v388
          %v471 = vunpack.c.l.b16 %v389
          %v472 = vunpack.c.h.b16 %v389
          %v473 = vunpack.c.l.b16 %v390
          %v474 = vunpack.c.h.b16 %v390
          %v475 = vpack.c.b16 %v445, %v443
          %v476 = vpack.c.b16 %v446, %v444
          %v477 = vpack.c.b16 %v449, %v447
          %v478 = vpack.c.b16 %v450, %v448
          %v479 = vpack.c.b16 %v453, %v451
          %v480 = vpack.c.b16 %v454, %v452
          %v481 = vpack.c.b16 %v457, %v455
          %v482 = vpack.c.b16 %v458, %v456
          %v483 = vpack.c.b16 %v461, %v459
          %v484 = vpack.c.b16 %v462, %v460
          %v485 = vpack.c.b16 %v465, %v463
          %v486 = vpack.c.b16 %v466, %v464
          %v487 = vpack.c.b16 %v469, %v467
          %v488 = vpack.c.b16 %v470, %v468
          %v489 = vpack.c.b16 %v473, %v471
          %v490 = vpack.c.b16 %v474, %v472
          %507 = vmatprep.subr.bf16.mxu0 %v490
          %508 = vmatpush1.bf16.msra.mxu0 %v489
          %509 = vmatprep.subr.bf16.mxu0 %v488
          %510 = vmatpush1.bf16.msra.mxu0 %v487
          %511 = vmatprep.subr.bf16.mxu0 %v486
          %512 = vmatpush1.bf16.msra.mxu0 %v485
          %513 = vmatprep.subr.bf16.mxu0 %v484
          %514 = vmatpush1.bf16.msra.mxu0 %v483
          %515 = vmatprep.subr.bf16.mxu0 %v482
          %516 = vmatpush1.bf16.msra.mxu0 %v481
          %517 = vmatprep.subr.bf16.mxu0 %v480
          %518 = vmatpush1.bf16.msra.mxu0 %v479
          %519 = vmatprep.subr.bf16.mxu0 %v478
          %520 = vmatpush1.bf16.msra.mxu0 %v477
          %521 = vmatprep.subr.bf16.mxu0 %v476
          %522 = vmatpush1.bf16.msra.mxu0 %v475
          %523 = vmatprep.subr.bf16.mxu0 0
          %524 = vmatpush2.bf16.msra.mxu0 0
          %525 = vmatprep.subr.bf16.mxu0 0
          %526 = vmatpush2.bf16.msra.mxu0 0
          %527 = vmatprep.subr.bf16.mxu0 0
          %528 = vmatpush2.bf16.msra.mxu0 0
          %529 = vmatprep.subr.bf16.mxu0 0
          %530 = vmatpush2.bf16.msra.mxu0 0
          %531 = vmatprep.subr.bf16.mxu0 0
          %532 = vmatpush2.bf16.msra.mxu0 0
          %533 = vmatprep.subr.bf16.mxu0 0
          %534 = vmatpush2.bf16.msra.mxu0 0
          %535 = vmatprep.subr.bf16.mxu0 0
          %536 = vmatpush2.bf16.msra.mxu0 0
          %537 = vmatprep.subr.bf16.mxu0 0
          %538 = vmatpush2.bf16.msra.mxu0 0
          %539 = vmatprep.mubr.bf16.mxu0 0
          %540 = vmatmul.mubr.bf16.gmra.mxu0 %v419
          %v541 = vpop.f32.mrf.mxu0
          %v542 = vadd.f32 %v396, %v541
          %v543 = vpop.f32.mrf.mxu0
          %v544 = vadd.f32 %v400, %v543
          %v545 = vpop.f32.mrf.mxu0
          %v546 = vadd.f32 %v396, %v545
          %v547 = vpop.f32.mrf.mxu0
          %v548 = vadd.f32 %v400, %v547
          %549 = vmatprep.mubr.bf16.mxu0 0
          %550 = vmatmul.mubr.bf16.gmra.mxu0 %v420
          %v551 = vpop.f32.mrf.mxu0
          %v552 = vadd.f32 %v396, %v551
          %v553 = vpop.f32.mrf.mxu0
          %v554 = vadd.f32 %v400, %v553
          %v555 = vpop.f32.mrf.mxu0
          %v556 = vadd.f32 %v396, %v555
          %v557 = vpop.f32.mrf.mxu0
          %v558 = vadd.f32 %v400, %v557
          %559 = vmatprep.mubr.bf16.mxu0 0
          %560 = vmatmul.mubr.bf16.gmra.mxu0 %v421
          %v561 = vpop.f32.mrf.mxu0
          %v562 = vadd.f32 %v396, %v561
          %v563 = vpop.f32.mrf.mxu0
          %v564 = vadd.f32 %v400, %v563
          %v565 = vpop.f32.mrf.mxu0
          %v566 = vadd.f32 %v396, %v565
          %v567 = vpop.f32.mrf.mxu0
          %v568 = vadd.f32 %v400, %v567
          %569 = vmatprep.mubr.bf16.mxu0 0
          %570 = vmatmul.mubr.bf16.gmra.mxu0 %v422
          %v571 = vpop.f32.mrf.mxu0
          %v572 = vadd.f32 %v396, %v571
          %v573 = vpop.f32.mrf.mxu0
          %v574 = vadd.f32 %v400, %v573
          %v575 = vpop.f32.mrf.mxu0
          %v576 = vadd.f32 %v396, %v575
          %v577 = vpop.f32.mrf.mxu0
          %v578 = vadd.f32 %v400, %v577
          %579 = vdwg.mxu0
          %v580 = vmul.f32 %v542, 0.5
          %v581 = vmul.f32 %v544, 0.5
          %v582 = vmul.f32 %v546, 0.5
          %v583 = vmul.f32 %v548, 0.5
          %v584 = vmul.f32 %v552, 0.5
          %v585 = vmul.f32 %v554, 0.5
          %v586 = vmul.f32 %v556, 0.5
          %v587 = vmul.f32 %v558, 0.5
          %v588 = vmul.f32 %v562, 0.5
          %v589 = vmul.f32 %v564, 0.5
          %v590 = vmul.f32 %v566, 0.5
          %v591 = vmul.f32 %v568, 0.5
          %v592 = vmul.f32 %v572, 0.5
          %v593 = vmul.f32 %v574, 0.5
          %v594 = vmul.f32 %v576, 0.5
          %v595 = vmul.f32 %v578, 0.5
          %v596 = vmul.f32 %v542, 0.044715
          %v597 = vmul.f32 %v544, 0.044715
          %v598 = vmul.f32 %v546, 0.044715
          %v599 = vmul.f32 %v548, 0.044715
          %v600 = vmul.f32 %v552, 0.044715
          %v601 = vmul.f32 %v554, 0.044715
          %v602 = vmul.f32 %v556, 0.044715
          %v603 = vmul.f32 %v558, 0.044715
          %v604 = vmul.f32 %v562, 0.044715
          %v605 = vmul.f32 %v564, 0.044715
          %v606 = vmul.f32 %v566, 0.044715
          %v607 = vmul.f32 %v568, 0.044715
          %v608 = vmul.f32 %v572, 0.044715
          %v609 = vmul.f32 %v574, 0.044715
          %v610 = vmul.f32 %v576, 0.044715
          %v611 = vmul.f32 %v578, 0.044715
          %v612 = vmul.f32 %v596, %v542
          %v613 = vmul.f32 %v597, %v544
          %v614 = vmul.f32 %v598, %v546
          %v615 = vmul.f32 %v599, %v548
          %v616 = vmul.f32 %v600, %v552
          %v617 = vmul.f32 %v601, %v554
          %v618 = vmul.f32 %v602, %v556
          %v619 = vmul.f32 %v603, %v558
          %v620 = vmul.f32 %v604, %v562
          %v621 = vmul.f32 %v605, %v564
          %v622 = vmul.f32 %v606, %v566
          %v623 = vmul.f32 %v607, %v568
          %v624 = vmul.f32 %v608, %v572
          %v625 = vmul.f32 %v609, %v574
          %v626 = vmul.f32 %v610, %v576
          %v627 = vmul.f32 %v611, %v578
          %v628 = vmul.f32 %v612, %v542
          %v629 = vmul.f32 %v613, %v544
          %v630 = vmul.f32 %v614, %v546
          %v631 = vmul.f32 %v615, %v548
          %v632 = vmul.f32 %v616, %v552
          %v633 = vmul.f32 %v617, %v554
          %v634 = vmul.f32 %v618, %v556
          %v635 = vmul.f32 %v619, %v558
          %v636 = vmul.f32 %v620, %v562
          %v637 = vmul.f32 %v621, %v564
          %v638 = vmul.f32 %v622, %v566
          %v639 = vmul.f32 %v623, %v568
          %v640 = vmul.f32 %v624, %v572
          %v641 = vmul.f32 %v625, %v574
          %v642 = vmul.f32 %v626, %v576
          %v643 = vmul.f32 %v627, %v578
          %v644 = vadd.f32 %v542, %v628
          %v645 = vadd.f32 %v544, %v629
          %v646 = vadd.f32 %v546, %v630
          %v647 = vadd.f32 %v548, %v631
          %v648 = vadd.f32 %v552, %v632
          %v649 = vadd.f32 %v554, %v633
          %v650 = vadd.f32 %v556, %v634
          %v651 = vadd.f32 %v558, %v635
          %v652 = vadd.f32 %v562, %v636
          %v653 = vadd.f32 %v564, %v637
          %v654 = vadd.f32 %v566, %v638
          %v655 = vadd.f32 %v568, %v639
          %v656 = vadd.f32 %v572, %v640
          %v657 = vadd.f32 %v574, %v641
          %v658 = vadd.f32 %v576, %v642
          %v659 = vadd.f32 %v578, %v643
          %v660 = vmul.f32 %v644, 0.7978846
          %v661 = vmul.f32 %v645, 0.7978846
          %v662 = vmul.f32 %v646, 0.7978846
          %v663 = vmul.f32 %v647, 0.7978846
          %v664 = vmul.f32 %v648, 0.7978846
          %v665 = vmul.f32 %v649, 0.7978846
          %v666 = vmul.f32 %v650, 0.7978846
          %v667 = vmul.f32 %v651, 0.7978846
          %v668 = vmul.f32 %v652, 0.7978846
          %v669 = vmul.f32 %v653, 0.7978846
          %v670 = vmul.f32 %v654, 0.7978846
          %v671 = vmul.f32 %v655, 0.7978846
          %v672 = vmul.f32 %v656, 0.7978846
          %v673 = vmul.f32 %v657, 0.7978846
          %v674 = vmul.f32 %v658, 0.7978846
          %v675 = vmul.f32 %v659, 0.7978846
          %v676 = vtanh.pop %v660
          %v677 = vtanh.pop %v661
          %v678 = vtanh.pop %v662
          %v679 = vtanh.pop %v663
          %v680 = vtanh.pop %v664
          %v681 = vtanh.pop %v665
          %v682 = vtanh.pop %v666
          %v683 = vtanh.pop %v667
          %v684 = vtanh.pop %v668
          %v685 = vtanh.pop %v669
          %v686 = vtanh.pop %v670
          %v687 = vtanh.pop %v671
          %v688 = vtanh.pop %v672
          %v689 = vtanh.pop %v673
          %v690 = vtanh.pop %v674
          %v691 = vtanh.pop %v675
          %v692 = vadd.f32 %v676, 1.0
          %v693 = vadd.f32 %v677, 1.0
          %v694 = vadd.f32 %v678, 1.0
          %v695 = vadd.f32 %v679, 1.0
          %v696 = vadd.f32 %v680, 1.0
          %v697 = vadd.f32 %v681, 1.0
          %v698 = vadd.f32 %v682, 1.0
          %v699 = vadd.f32 %v683, 1.0
          %v700 = vadd.f32 %v684, 1.0
          %v701 = vadd.f32 %v685, 1.0
          %v702 = vadd.f32 %v686, 1.0
          %v703 = vadd.f32 %v687, 1.0
          %v704 = vadd.f32 %v688, 1.0
          %v705 = vadd.f32 %v689, 1.0
          %v706 = vadd.f32 %v690, 1.0
          %v707 = vadd.f32 %v691, 1.0
          %v708 = vmul.f32 %v580, %v692
          %v709 = vmul.f32 %v581, %v693
          %v710 = vmul.f32 %v582, %v694
          %v711 = vmul.f32 %v583, %v695
          %v712 = vmul.f32 %v584, %v696
          %v713 = vmul.f32 %v585, %v697
          %v714 = vmul.f32 %v586, %v698
          %v715 = vmul.f32 %v587, %v699
          %v716 = vmul.f32 %v588, %v700
          %v717 = vmul.f32 %v589, %v701
          %v718 = vmul.f32 %v590, %v702
          %v719 = vmul.f32 %v591, %v703
          %v720 = vmul.f32 %v592, %v704
          %v721 = vmul.f32 %v593, %v705
          %v722 = vmul.f32 %v594, %v706
          %v723 = vmul.f32 %v595, %v707
          %v724 = vlaneseq
          %v725 = vand.u32 %v724, 127
          %v726 = vadd.s32 %v725, 128
          %v727 = vmax.f32 %v708, %v709
          %728 = vmax.xlane.f32.xlu0 %v727
          %v729 = vpop.xlane.xlu0 %728
          %v730 = vmax.f32 %v710, %v711
          %731 = vmax.xlane.f32.xlu0 %v730
          %v732 = vpop.xlane.xlu0 %731
          %v733 = vmax.f32 %v712, %v713
          %734 = vmax.xlane.f32.xlu0 %v733
          %v735 = vpop.xlane.xlu0 %734
          %v736 = vmax.f32 %v714, %v715
          %737 = vmax.xlane.f32.xlu0 %v736
          %v738 = vpop.xlane.xlu0 %737
          %v739 = vmax.f32 %v716, %v717
          %740 = vmax.xlane.f32.xlu0 %v739
          %v741 = vpop.xlane.xlu0 %740
          %v742 = vmax.f32 %v718, %v719
          %743 = vmax.xlane.f32.xlu0 %v742
          %v744 = vpop.xlane.xlu0 %743
          %v745 = vmax.f32 %v720, %v721
          %746 = vmax.xlane.f32.xlu0 %v745
          %v747 = vpop.xlane.xlu0 %746
          %v748 = vmax.f32 %v722, %v723
          %749 = vmax.xlane.f32.xlu0 %v748
          %v750 = vpop.xlane.xlu0 %749
          %vm751 = vcmp.eq.f32.partialorder %v708, %v729
          %vm752 = vcmp.eq.f32.partialorder %v709, %v729
          %vm753 = vcmp.eq.f32.partialorder %v710, %v732
          %vm754 = vcmp.eq.f32.partialorder %v711, %v732
          %vm755 = vcmp.eq.f32.partialorder %v712, %v735
          %vm756 = vcmp.eq.f32.partialorder %v713, %v735
          %vm757 = vcmp.eq.f32.partialorder %v714, %v738
          %vm758 = vcmp.eq.f32.partialorder %v715, %v738
          %vm759 = vcmp.eq.f32.partialorder %v716, %v741
          %vm760 = vcmp.eq.f32.partialorder %v717, %v741
          %vm761 = vcmp.eq.f32.partialorder %v718, %v744
          %vm762 = vcmp.eq.f32.partialorder %v719, %v744
          %vm763 = vcmp.eq.f32.partialorder %v720, %v747
          %vm764 = vcmp.eq.f32.partialorder %v721, %v747
          %vm765 = vcmp.eq.f32.partialorder %v722, %v750
          %vm766 = vcmp.eq.f32.partialorder %v723, %v750
          %v767 = vsel %vm751, %v725, 256
          %v768 = vsel %vm752, %v726, 256
          %v769 = vsel %vm753, %v725, 256
          %v770 = vsel %vm754, %v726, 256
          %v771 = vsel %vm755, %v725, 256
          %v772 = vsel %vm756, %v726, 256
          %v773 = vsel %vm757, %v725, 256
          %v774 = vsel %vm758, %v726, 256
          %v775 = vsel %vm759, %v725, 256
          %v776 = vsel %vm760, %v726, 256
          %v777 = vsel %vm761, %v725, 256
          %v778 = vsel %vm762, %v726, 256
          %v779 = vsel %vm763, %v725, 256
          %v780 = vsel %vm764, %v726, 256
          %v781 = vsel %vm765, %v725, 256
          %v782 = vsel %vm766, %v726, 256
          %vm783 = vcmp.lt.s32.totalorder %v767, %v768
          %v784 = vsel %vm783, %v767, %v768
          %v785 = vand.u32 %v784, 65535
          %v786 = vshra.s32 %v784, 16
          %v787 = vcvt.s32.f32 %v785
          %v788 = vcvt.s32.f32 %v786
          %789 = vmin.xlane.f32.xlu0 %v788
          %v790 = vpop.xlane.xlu0 %789
          %vm791 = vcmp.eq.f32.partialorder %v788, %v790
          %v792 = vsel %vm791, %v787, inf
          %793 = vmin.xlane.f32.xlu0 %v792
          %v794 = vpop.xlane.xlu0 %793
          %v795 = vcvt.f32.s32 %v794
          %v796 = vcvt.f32.s32 %v790
          %v797 = vshll.u32 %v796, 16
          %v798 = vadd.s32 %v797, %v795
          %vm799 = vcmp.lt.s32.totalorder %v769, %v770
          %v800 = vsel %vm799, %v769, %v770
          %v801 = vand.u32 %v800, 65535
          %v802 = vshra.s32 %v800, 16
          %v803 = vcvt.s32.f32 %v801
          %v804 = vcvt.s32.f32 %v802
          %805 = vmin.xlane.f32.xlu0 %v804
          %v806 = vpop.xlane.xlu0 %805
          %vm807 = vcmp.eq.f32.partialorder %v804, %v806
          %v808 = vsel %vm807, %v803, inf
          %809 = vmin.xlane.f32.xlu0 %v808
          %v810 = vpop.xlane.xlu0 %809
          %v811 = vcvt.f32.s32 %v810
          %v812 = vcvt.f32.s32 %v806
          %v813 = vshll.u32 %v812, 16
          %v814 = vadd.s32 %v813, %v811
          %vm815 = vcmp.lt.s32.totalorder %v771, %v772
          %v816 = vsel %vm815, %v771, %v772
          %v817 = vand.u32 %v816, 65535
          %v818 = vshra.s32 %v816, 16
          %v819 = vcvt.s32.f32 %v817
          %v820 = vcvt.s32.f32 %v818
          %821 = vmin.xlane.f32.xlu0 %v820
          %v822 = vpop.xlane.xlu0 %821
          %vm823 = vcmp.eq.f32.partialorder %v820, %v822
          %v824 = vsel %vm823, %v819, inf
          %825 = vmin.xlane.f32.xlu0 %v824
          %v826 = vpop.xlane.xlu0 %825
          %v827 = vcvt.f32.s32 %v826
          %v828 = vcvt.f32.s32 %v822
          %v829 = vshll.u32 %v828, 16
          %v830 = vadd.s32 %v829, %v827
          %vm831 = vcmp.lt.s32.totalorder %v773, %v774
          %v832 = vsel %vm831, %v773, %v774
          %v833 = vand.u32 %v832, 65535
          %v834 = vshra.s32 %v832, 16
          %v835 = vcvt.s32.f32 %v833
          %v836 = vcvt.s32.f32 %v834
          %837 = vmin.xlane.f32.xlu0 %v836
          %v838 = vpop.xlane.xlu0 %837
          %vm839 = vcmp.eq.f32.partialorder %v836, %v838
          %v840 = vsel %vm839, %v835, inf
          %841 = vmin.xlane.f32.xlu0 %v840
          %v842 = vpop.xlane.xlu0 %841
          %v843 = vcvt.f32.s32 %v842
          %v844 = vcvt.f32.s32 %v838
          %v845 = vshll.u32 %v844, 16
          %v846 = vadd.s32 %v845, %v843
          %vm847 = vcmp.lt.s32.totalorder %v775, %v776
          %v848 = vsel %vm847, %v775, %v776
          %v849 = vand.u32 %v848, 65535
          %v850 = vshra.s32 %v848, 16
          %v851 = vcvt.s32.f32 %v849
          %v852 = vcvt.s32.f32 %v850
          %853 = vmin.xlane.f32.xlu0 %v852
          %v854 = vpop.xlane.xlu0 %853
          %vm855 = vcmp.eq.f32.partialorder %v852, %v854
          %v856 = vsel %vm855, %v851, inf
          %857 = vmin.xlane.f32.xlu0 %v856
          %v858 = vpop.xlane.xlu0 %857
          %v859 = vcvt.f32.s32 %v858
          %v860 = vcvt.f32.s32 %v854
          %v861 = vshll.u32 %v860, 16
          %v862 = vadd.s32 %v861, %v859
          %vm863 = vcmp.lt.s32.totalorder %v777, %v778
          %v864 = vsel %vm863, %v777, %v778
          %v865 = vand.u32 %v864, 65535
          %v866 = vshra.s32 %v864, 16
          %v867 = vcvt.s32.f32 %v865
          %v868 = vcvt.s32.f32 %v866
          %869 = vmin.xlane.f32.xlu0 %v868
          %v870 = vpop.xlane.xlu0 %869
          %vm871 = vcmp.eq.f32.partialorder %v868, %v870
          %v872 = vsel %vm871, %v867, inf
          %873 = vmin.xlane.f32.xlu0 %v872
          %v874 = vpop.xlane.xlu0 %873
          %v875 = vcvt.f32.s32 %v874
          %v876 = vcvt.f32.s32 %v870
          %v877 = vshll.u32 %v876, 16
          %v878 = vadd.s32 %v877, %v875
          %vm879 = vcmp.lt.s32.totalorder %v779, %v780
          %v880 = vsel %vm879, %v779, %v780
          %v881 = vand.u32 %v880, 65535
          %v882 = vshra.s32 %v880, 16
          %v883 = vcvt.s32.f32 %v881
          %v884 = vcvt.s32.f32 %v882
          %885 = vmin.xlane.f32.xlu0 %v884
          %v886 = vpop.xlane.xlu0 %885
          %vm887 = vcmp.eq.f32.partialorder %v884, %v886
          %v888 = vsel %vm887, %v883, inf
          %889 = vmin.xlane.f32.xlu0 %v888
          %v890 = vpop.xlane.xlu0 %889
          %v891 = vcvt.f32.s32 %v890
          %v892 = vcvt.f32.s32 %v886
          %v893 = vshll.u32 %v892, 16
          %v894 = vadd.s32 %v893, %v891
          %vm895 = vcmp.lt.s32.totalorder %v781, %v782
          %v896 = vsel %vm895, %v781, %v782
          %v897 = vand.u32 %v896, 65535
          %v898 = vshra.s32 %v896, 16
          %v899 = vcvt.s32.f32 %v897
          %v900 = vcvt.s32.f32 %v898
          %901 = vmin.xlane.f32.xlu0 %v900
          %v902 = vpop.xlane.xlu0 %901
          %vm903 = vcmp.eq.f32.partialorder %v900, %v902
          %v904 = vsel %vm903, %v899, inf
          %905 = vmin.xlane.f32.xlu0 %v904
          %v906 = vpop.xlane.xlu0 %905
          %v907 = vcvt.f32.s32 %v906
          %v908 = vcvt.f32.s32 %v902
          %v909 = vshll.u32 %v908, 16
          %v910 = vadd.s32 %v909, %v907
          %vm911 = vcmp.eq.s32.totalorder %v725, %v798
          %vm912 = vcmp.eq.s32.totalorder %v726, %v798
          %vm913 = vcmp.eq.s32.totalorder %v725, %v814
          %vm914 = vcmp.eq.s32.totalorder %v726, %v814
          %vm915 = vcmp.eq.s32.totalorder %v725, %v830
          %vm916 = vcmp.eq.s32.totalorder %v726, %v830
          %vm917 = vcmp.eq.s32.totalorder %v725, %v846
          %vm918 = vcmp.eq.s32.totalorder %v726, %v846
          %vm919 = vcmp.eq.s32.totalorder %v725, %v862
          %vm920 = vcmp.eq.s32.totalorder %v726, %v862
          %vm921 = vcmp.eq.s32.totalorder %v725, %v878
          %vm922 = vcmp.eq.s32.totalorder %v726, %v878
          %vm923 = vcmp.eq.s32.totalorder %v725, %v894
          %vm924 = vcmp.eq.s32.totalorder %v726, %v894
          %vm925 = vcmp.eq.s32.totalorder %v725, %v910
          %vm926 = vcmp.eq.s32.totalorder %v726, %v910
          %v927 = vsel %vm911, %v729, 0.0
          %v928 = vsel %vm912, %v729, 0.0
          %v929 = vsel %vm913, %v732, 0.0
          %v930 = vsel %vm914, %v732, 0.0
          %v931 = vsel %vm915, %v735, 0.0
          %v932 = vsel %vm916, %v735, 0.0
          %v933 = vsel %vm917, %v738, 0.0
          %v934 = vsel %vm918, %v738, 0.0
          %v935 = vsel %vm919, %v741, 0.0
          %v936 = vsel %vm920, %v741, 0.0
          %v937 = vsel %vm921, %v744, 0.0
          %v938 = vsel %vm922, %v744, 0.0
          %v939 = vsel %vm923, %v747, 0.0
          %v940 = vsel %vm924, %v747, 0.0
          %v941 = vsel %vm925, %v750, 0.0
          %v942 = vsel %vm926, %v750, 0.0
          %v943 = vsel %vm911, -inf, %v708
          %v944 = vsel %vm912, -inf, %v709
          %v945 = vsel %vm913, -inf, %v710
          %v946 = vsel %vm914, -inf, %v711
          %v947 = vsel %vm915, -inf, %v712
          %v948 = vsel %vm916, -inf, %v713
          %v949 = vsel %vm917, -inf, %v714
          %v950 = vsel %vm918, -inf, %v715
          %v951 = vsel %vm919, -inf, %v716
          %v952 = vsel %vm920, -inf, %v717
          %v953 = vsel %vm921, -inf, %v718
          %v954 = vsel %vm922, -inf, %v719
          %v955 = vsel %vm923, -inf, %v720
          %v956 = vsel %vm924, -inf, %v721
          %v957 = vsel %vm925, -inf, %v722
          %v958 = vsel %vm926, -inf, %v723
          %s959 = scalar_lea.vmem %s353, %s362
          %vm960 = vcmask 7168
          %961 = vst.msk [vmem:[%s959] sm:$0xff] %vm960, %v729
          %962 = vst.msk [vmem:[%s959 + $0x8] sm:$0xff] %vm960, %v732
          %963 = vst.msk [vmem:[%s959 + $0x10] sm:$0xff] %vm960, %v735
          %964 = vst.msk [vmem:[%s959 + $0x18] sm:$0xff] %vm960, %v738
          %965 = vst.msk [vmem:[%s959 + $0x20] sm:$0xff] %vm960, %v741
          %966 = vst.msk [vmem:[%s959 + $0x28] sm:$0xff] %vm960, %v744
          %967 = vst.msk [vmem:[%s959 + $0x30] sm:$0xff] %vm960, %v747
          %968 = vst.msk [vmem:[%s959 + $0x38] sm:$0xff] %vm960, %v750
          %s969 = scalar_lea.vmem %s347, %s362
          %970 = vst.msk [vmem:[%s969] sm:$0xff] %vm960, %v798
          %971 = vst.msk [vmem:[%s969 + $0x8] sm:$0xff] %vm960, %v814
          %972 = vst.msk [vmem:[%s969 + $0x10] sm:$0xff] %vm960, %v830
          %973 = vst.msk [vmem:[%s969 + $0x18] sm:$0xff] %vm960, %v846
          %974 = vst.msk [vmem:[%s969 + $0x20] sm:$0xff] %vm960, %v862
          %975 = vst.msk [vmem:[%s969 + $0x28] sm:$0xff] %vm960, %v878
          %976 = vst.msk [vmem:[%s969 + $0x30] sm:$0xff] %vm960, %v894
          %977 = vst.msk [vmem:[%s969 + $0x38] sm:$0xff] %vm960, %v910
          %v978 = vmax.f32 %v943, %v944
          %979 = vmax.xlane.f32.xlu0 %v978
          %v980 = vpop.xlane.xlu0 %979
          %v981 = vmax.f32 %v945, %v946
          %982 = vmax.xlane.f32.xlu0 %v981
          %v983 = vpop.xlane.xlu0 %982
          %v984 = vmax.f32 %v947, %v948
          %985 = vmax.xlane.f32.xlu0 %v984
          %v986 = vpop.xlane.xlu0 %985
          %v987 = vmax.f32 %v949, %v950
          %988 = vmax.xlane.f32.xlu0 %v987
          %v989 = vpop.xlane.xlu0 %988
          %v990 = vmax.f32 %v951, %v952
          %991 = vmax.xlane.f32.xlu0 %v990
          %v992 = vpop.xlane.xlu0 %991
          %v993 = vmax.f32 %v953, %v954
          %994 = vmax.xlane.f32.xlu0 %v993
          %v995 = vpop.xlane.xlu0 %994
          %v996 = vmax.f32 %v955, %v956
          %997 = vmax.xlane.f32.xlu0 %v996
          %v998 = vpop.xlane.xlu0 %997
          %v999 = vmax.f32 %v957, %v958
          %1000 = vmax.xlane.f32.xlu0 %v999
          %v1001 = vpop.xlane.xlu0 %1000
          %vm1002 = vcmp.eq.f32.partialorder %v943, %v980
          %vm1003 = vcmp.eq.f32.partialorder %v944, %v980
          %vm1004 = vcmp.eq.f32.partialorder %v945, %v983
          %vm1005 = vcmp.eq.f32.partialorder %v946, %v983
          %vm1006 = vcmp.eq.f32.partialorder %v947, %v986
          %vm1007 = vcmp.eq.f32.partialorder %v948, %v986
          %vm1008 = vcmp.eq.f32.partialorder %v949, %v989
          %vm1009 = vcmp.eq.f32.partialorder %v950, %v989
          %vm1010 = vcmp.eq.f32.partialorder %v951, %v992
          %vm1011 = vcmp.eq.f32.partialorder %v952, %v992
          %vm1012 = vcmp.eq.f32.partialorder %v953, %v995
          %vm1013 = vcmp.eq.f32.partialorder %v954, %v995
          %vm1014 = vcmp.eq.f32.partialorder %v955, %v998
          %vm1015 = vcmp.eq.f32.partialorder %v956, %v998
          %vm1016 = vcmp.eq.f32.partialorder %v957, %v1001
          %vm1017 = vcmp.eq.f32.partialorder %v958, %v1001
          %v1018 = vsel %vm1002, %v725, 256
          %v1019 = vsel %vm1003, %v726, 256
          %v1020 = vsel %vm1004, %v725, 256
          %v1021 = vsel %vm1005, %v726, 256
          %v1022 = vsel %vm1006, %v725, 256
          %v1023 = vsel %vm1007, %v726, 256
          %v1024 = vsel %vm1008, %v725, 256
          %v1025 = vsel %vm1009, %v726, 256
          %v1026 = vsel %vm1010, %v725, 256
          %v1027 = vsel %vm1011, %v726, 256
          %v1028 = vsel %vm1012, %v725, 256
          %v1029 = vsel %vm1013, %v726, 256
          %v1030 = vsel %vm1014, %v725, 256
          %v1031 = vsel %vm1015, %v726, 256
          %v1032 = vsel %vm1016, %v725, 256
          %v1033 = vsel %vm1017, %v726, 256
          %vm1034 = vcmp.lt.s32.totalorder %v1018, %v1019
          %v1035 = vsel %vm1034, %v1018, %v1019
          %v1036 = vand.u32 %v1035, 65535
          %v1037 = vshra.s32 %v1035, 16
          %v1038 = vcvt.s32.f32 %v1036
          %v1039 = vcvt.s32.f32 %v1037
          %1040 = vmin.xlane.f32.xlu0 %v1039
          %v1041 = vpop.xlane.xlu0 %1040
          %vm1042 = vcmp.eq.f32.partialorder %v1039, %v1041
          %v1043 = vsel %vm1042, %v1038, inf
          %1044 = vmin.xlane.f32.xlu0 %v1043
          %v1045 = vpop.xlane.xlu0 %1044
          %v1046 = vcvt.f32.s32 %v1045
          %v1047 = vcvt.f32.s32 %v1041
          %v1048 = vshll.u32 %v1047, 16
          %v1049 = vadd.s32 %v1048, %v1046
          %vm1050 = vcmp.lt.s32.totalorder %v1020, %v1021
          %v1051 = vsel %vm1050, %v1020, %v1021
          %v1052 = vand.u32 %v1051, 65535
          %v1053 = vshra.s32 %v1051, 16
          %v1054 = vcvt.s32.f32 %v1052
          %v1055 = vcvt.s32.f32 %v1053
          %1056 = vmin.xlane.f32.xlu0 %v1055
          %v1057 = vpop.xlane.xlu0 %1056
          %vm1058 = vcmp.eq.f32.partialorder %v1055, %v1057
          %v1059 = vsel %vm1058, %v1054, inf
          %1060 = vmin.xlane.f32.xlu0 %v1059
          %v1061 = vpop.xlane.xlu0 %1060
          %v1062 = vcvt.f32.s32 %v1061
          %v1063 = vcvt.f32.s32 %v1057
          %v1064 = vshll.u32 %v1063, 16
          %v1065 = vadd.s32 %v1064, %v1062
          %vm1066 = vcmp.lt.s32.totalorder %v1022, %v1023
          %v1067 = vsel %vm1066, %v1022, %v1023
          %v1068 = vand.u32 %v1067, 65535
          %v1069 = vshra.s32 %v1067, 16
          %v1070 = vcvt.s32.f32 %v1068
          %v1071 = vcvt.s32.f32 %v1069
          %1072 = vmin.xlane.f32.xlu0 %v1071
          %v1073 = vpop.xlane.xlu0 %1072
          %vm1074 = vcmp.eq.f32.partialorder %v1071, %v1073
          %v1075 = vsel %vm1074, %v1070, inf
          %1076 = vmin.xlane.f32.xlu0 %v1075
          %v1077 = vpop.xlane.xlu0 %1076
          %v1078 = vcvt.f32.s32 %v1077
          %v1079 = vcvt.f32.s32 %v1073
          %v1080 = vshll.u32 %v1079, 16
          %v1081 = vadd.s32 %v1080, %v1078
          %vm1082 = vcmp.lt.s32.totalorder %v1024, %v1025
          %v1083 = vsel %vm1082, %v1024, %v1025
          %v1084 = vand.u32 %v1083, 65535
          %v1085 = vshra.s32 %v1083, 16
          %v1086 = vcvt.s32.f32 %v1084
          %v1087 = vcvt.s32.f32 %v1085
          %1088 = vmin.xlane.f32.xlu0 %v1087
          %v1089 = vpop.xlane.xlu0 %1088
          %vm1090 = vcmp.eq.f32.partialorder %v1087, %v1089
          %v1091 = vsel %vm1090, %v1086, inf
          %1092 = vmin.xlane.f32.xlu0 %v1091
          %v1093 = vpop.xlane.xlu0 %1092
          %v1094 = vcvt.f32.s32 %v1093
          %v1095 = vcvt.f32.s32 %v1089
          %v1096 = vshll.u32 %v1095, 16
          %v1097 = vadd.s32 %v1096, %v1094
          %vm1098 = vcmp.lt.s32.totalorder %v1026, %v1027
          %v1099 = vsel %vm1098, %v1026, %v1027
          %v1100 = vand.u32 %v1099, 65535
          %v1101 = vshra.s32 %v1099, 16
          %v1102 = vcvt.s32.f32 %v1100
          %v1103 = vcvt.s32.f32 %v1101
          %1104 = vmin.xlane.f32.xlu0 %v1103
          %v1105 = vpop.xlane.xlu0 %1104
          %vm1106 = vcmp.eq.f32.partialorder %v1103, %v1105
          %v1107 = vsel %vm1106, %v1102, inf
          %1108 = vmin.xlane.f32.xlu0 %v1107
          %v1109 = vpop.xlane.xlu0 %1108
          %v1110 = vcvt.f32.s32 %v1109
          %v1111 = vcvt.f32.s32 %v1105
          %v1112 = vshll.u32 %v1111, 16
          %v1113 = vadd.s32 %v1112, %v1110
          %vm1114 = vcmp.lt.s32.totalorder %v1028, %v1029
          %v1115 = vsel %vm1114, %v1028, %v1029
          %v1116 = vand.u32 %v1115, 65535
          %v1117 = vshra.s32 %v1115, 16
          %v1118 = vcvt.s32.f32 %v1116
          %v1119 = vcvt.s32.f32 %v1117
          %1120 = vmin.xlane.f32.xlu0 %v1119
          %v1121 = vpop.xlane.xlu0 %1120
          %vm1122 = vcmp.eq.f32.partialorder %v1119, %v1121
          %v1123 = vsel %vm1122, %v1118, inf
          %1124 = vmin.xlane.f32.xlu0 %v1123
          %v1125 = vpop.xlane.xlu0 %1124
          %v1126 = vcvt.f32.s32 %v1125
          %v1127 = vcvt.f32.s32 %v1121
          %v1128 = vshll.u32 %v1127, 16
          %v1129 = vadd.s32 %v1128, %v1126
          %vm1130 = vcmp.lt.s32.totalorder %v1030, %v1031
          %v1131 = vsel %vm1130, %v1030, %v1031
          %v1132 = vand.u32 %v1131, 65535
          %v1133 = vshra.s32 %v1131, 16
          %v1134 = vcvt.s32.f32 %v1132
          %v1135 = vcvt.s32.f32 %v1133
          %1136 = vmin.xlane.f32.xlu0 %v1135
          %v1137 = vpop.xlane.xlu0 %1136
          %vm1138 = vcmp.eq.f32.partialorder %v1135, %v1137
          %v1139 = vsel %vm1138, %v1134, inf
          %1140 = vmin.xlane.f32.xlu0 %v1139
          %v1141 = vpop.xlane.xlu0 %1140
          %v1142 = vcvt.f32.s32 %v1141
          %v1143 = vcvt.f32.s32 %v1137
          %v1144 = vshll.u32 %v1143, 16
          %v1145 = vadd.s32 %v1144, %v1142
          %vm1146 = vcmp.lt.s32.totalorder %v1032, %v1033
          %v1147 = vsel %vm1146, %v1032, %v1033
          %v1148 = vand.u32 %v1147, 65535
          %v1149 = vshra.s32 %v1147, 16
          %v1150 = vcvt.s32.f32 %v1148
          %v1151 = vcvt.s32.f32 %v1149
          %1152 = vmin.xlane.f32.xlu0 %v1151
          %v1153 = vpop.xlane.xlu0 %1152
          %vm1154 = vcmp.eq.f32.partialorder %v1151, %v1153
          %v1155 = vsel %vm1154, %v1150, inf
          %1156 = vmin.xlane.f32.xlu0 %v1155
          %v1157 = vpop.xlane.xlu0 %1156
          %v1158 = vcvt.f32.s32 %v1157
          %v1159 = vcvt.f32.s32 %v1153
          %v1160 = vshll.u32 %v1159, 16
          %v1161 = vadd.s32 %v1160, %v1158
          %vm1162 = vcmp.eq.s32.totalorder %v725, %v1049
          %vm1163 = vcmp.eq.s32.totalorder %v726, %v1049
          %vm1164 = vcmp.eq.s32.totalorder %v725, %v1065
          %vm1165 = vcmp.eq.s32.totalorder %v726, %v1065
          %vm1166 = vcmp.eq.s32.totalorder %v725, %v1081
          %vm1167 = vcmp.eq.s32.totalorder %v726, %v1081
          %vm1168 = vcmp.eq.s32.totalorder %v725, %v1097
          %vm1169 = vcmp.eq.s32.totalorder %v726, %v1097
          %vm1170 = vcmp.eq.s32.totalorder %v725, %v1113
          %vm1171 = vcmp.eq.s32.totalorder %v726, %v1113
          %vm1172 = vcmp.eq.s32.totalorder %v725, %v1129
          %vm1173 = vcmp.eq.s32.totalorder %v726, %v1129
          %vm1174 = vcmp.eq.s32.totalorder %v725, %v1145
          %vm1175 = vcmp.eq.s32.totalorder %v726, %v1145
          %vm1176 = vcmp.eq.s32.totalorder %v725, %v1161
          %vm1177 = vcmp.eq.s32.totalorder %v726, %v1161
          %v1178 = vsel %vm1162, %v980, %v927
          %v1179 = vsel %vm1163, %v980, %v928
          %v1180 = vsel %vm1164, %v983, %v929
          %v1181 = vsel %vm1165, %v983, %v930
          %v1182 = vsel %vm1166, %v986, %v931
          %v1183 = vsel %vm1167, %v986, %v932
          %v1184 = vsel %vm1168, %v989, %v933
          %v1185 = vsel %vm1169, %v989, %v934
          %v1186 = vsel %vm1170, %v992, %v935
          %v1187 = vsel %vm1171, %v992, %v936
          %v1188 = vsel %vm1172, %v995, %v937
          %v1189 = vsel %vm1173, %v995, %v938
          %v1190 = vsel %vm1174, %v998, %v939
          %v1191 = vsel %vm1175, %v998, %v940
          %v1192 = vsel %vm1176, %v1001, %v941
          %v1193 = vsel %vm1177, %v1001, %v942
          %v1194 = vsel %vm1162, -inf, %v943
          %v1195 = vsel %vm1163, -inf, %v944
          %v1196 = vsel %vm1164, -inf, %v945
          %v1197 = vsel %vm1165, -inf, %v946
          %v1198 = vsel %vm1166, -inf, %v947
          %v1199 = vsel %vm1167, -inf, %v948
          %v1200 = vsel %vm1168, -inf, %v949
          %v1201 = vsel %vm1169, -inf, %v950
          %v1202 = vsel %vm1170, -inf, %v951
          %v1203 = vsel %vm1171, -inf, %v952
          %v1204 = vsel %vm1172, -inf, %v953
          %v1205 = vsel %vm1173, -inf, %v954
          %v1206 = vsel %vm1174, -inf, %v955
          %v1207 = vsel %vm1175, -inf, %v956
          %v1208 = vsel %vm1176, -inf, %v957
          %v1209 = vsel %vm1177, -inf, %v958
          %vm1210 = vcmask 15368
          %1211 = vst.msk [vmem:[%s959] sm:$0xff] %vm1210, %v980
          %1212 = vst.msk [vmem:[%s959 + $0x8] sm:$0xff] %vm1210, %v983
          %1213 = vst.msk [vmem:[%s959 + $0x10] sm:$0xff] %vm1210, %v986
          %1214 = vst.msk [vmem:[%s959 + $0x18] sm:$0xff] %vm1210, %v989
          %1215 = vst.msk [vmem:[%s959 + $0x20] sm:$0xff] %vm1210, %v992
          %1216 = vst.msk [vmem:[%s959 + $0x28] sm:$0xff] %vm1210, %v995
          %1217 = vst.msk [vmem:[%s959 + $0x30] sm:$0xff] %vm1210, %v998
          %1218 = vst.msk [vmem:[%s959 + $0x38] sm:$0xff] %vm1210, %v1001
          %1219 = vst.msk [vmem:[%s969] sm:$0xff] %vm1210, %v1049
          %1220 = vst.msk [vmem:[%s969 + $0x8] sm:$0xff] %vm1210, %v1065
          %1221 = vst.msk [vmem:[%s969 + $0x10] sm:$0xff] %vm1210, %v1081
          %1222 = vst.msk [vmem:[%s969 + $0x18] sm:$0xff] %vm1210, %v1097
          %1223 = vst.msk [vmem:[%s969 + $0x20] sm:$0xff] %vm1210, %v1113
          %1224 = vst.msk [vmem:[%s969 + $0x28] sm:$0xff] %vm1210, %v1129
          %1225 = vst.msk [vmem:[%s969 + $0x30] sm:$0xff] %vm1210, %v1145
          %1226 = vst.msk [vmem:[%s969 + $0x38] sm:$0xff] %vm1210, %v1161
          %v1227 = vmax.f32 %v1194, %v1195
          %1228 = vmax.xlane.f32.xlu0 %v1227
          %v1229 = vpop.xlane.xlu0 %1228
          %v1230 = vmax.f32 %v1196, %v1197
          %1231 = vmax.xlane.f32.xlu0 %v1230
          %v1232 = vpop.xlane.xlu0 %1231
          %v1233 = vmax.f32 %v1198, %v1199
          %1234 = vmax.xlane.f32.xlu0 %v1233
          %v1235 = vpop.xlane.xlu0 %1234
          %v1236 = vmax.f32 %v1200, %v1201
          %1237 = vmax.xlane.f32.xlu0 %v1236
          %v1238 = vpop.xlane.xlu0 %1237
          %v1239 = vmax.f32 %v1202, %v1203
          %1240 = vmax.xlane.f32.xlu0 %v1239
          %v1241 = vpop.xlane.xlu0 %1240
          %v1242 = vmax.f32 %v1204, %v1205
          %1243 = vmax.xlane.f32.xlu0 %v1242
          %v1244 = vpop.xlane.xlu0 %1243
          %v1245 = vmax.f32 %v1206, %v1207
          %1246 = vmax.xlane.f32.xlu0 %v1245
          %v1247 = vpop.xlane.xlu0 %1246
          %v1248 = vmax.f32 %v1208, %v1209
          %1249 = vmax.xlane.f32.xlu0 %v1248
          %v1250 = vpop.xlane.xlu0 %1249
          %vm1251 = vcmp.eq.f32.partialorder %v1194, %v1229
          %vm1252 = vcmp.eq.f32.partialorder %v1195, %v1229
          %vm1253 = vcmp.eq.f32.partialorder %v1196, %v1232
          %vm1254 = vcmp.eq.f32.partialorder %v1197, %v1232
          %vm1255 = vcmp.eq.f32.partialorder %v1198, %v1235
          %vm1256 = vcmp.eq.f32.partialorder %v1199, %v1235
          %vm1257 = vcmp.eq.f32.partialorder %v1200, %v1238
          %vm1258 = vcmp.eq.f32.partialorder %v1201, %v1238
          %vm1259 = vcmp.eq.f32.partialorder %v1202, %v1241
          %vm1260 = vcmp.eq.f32.partialorder %v1203, %v1241
          %vm1261 = vcmp.eq.f32.partialorder %v1204, %v1244
          %vm1262 = vcmp.eq.f32.partialorder %v1205, %v1244
          %vm1263 = vcmp.eq.f32.partialorder %v1206, %v1247
          %vm1264 = vcmp.eq.f32.partialorder %v1207, %v1247
          %vm1265 = vcmp.eq.f32.partialorder %v1208, %v1250
          %vm1266 = vcmp.eq.f32.partialorder %v1209, %v1250
          %v1267 = vsel %vm1251, %v725, 256
          %v1268 = vsel %vm1252, %v726, 256
          %v1269 = vsel %vm1253, %v725, 256
          %v1270 = vsel %vm1254, %v726, 256
          %v1271 = vsel %vm1255, %v725, 256
          %v1272 = vsel %vm1256, %v726, 256
          %v1273 = vsel %vm1257, %v725, 256
          %v1274 = vsel %vm1258, %v726, 256
          %v1275 = vsel %vm1259, %v725, 256
          %v1276 = vsel %vm1260, %v726, 256
          %v1277 = vsel %vm1261, %v725, 256
          %v1278 = vsel %vm1262, %v726, 256
          %v1279 = vsel %vm1263, %v725, 256
          %v1280 = vsel %vm1264, %v726, 256
          %v1281 = vsel %vm1265, %v725, 256
          %v1282 = vsel %vm1266, %v726, 256
          %vm1283 = vcmp.lt.s32.totalorder %v1267, %v1268
          %v1284 = vsel %vm1283, %v1267, %v1268
          %v1285 = vand.u32 %v1284, 65535
          %v1286 = vshra.s32 %v1284, 16
          %v1287 = vcvt.s32.f32 %v1285
          %v1288 = vcvt.s32.f32 %v1286
          %1289 = vmin.xlane.f32.xlu0 %v1288
          %v1290 = vpop.xlane.xlu0 %1289
          %vm1291 = vcmp.eq.f32.partialorder %v1288, %v1290
          %v1292 = vsel %vm1291, %v1287, inf
          %1293 = vmin.xlane.f32.xlu0 %v1292
          %v1294 = vpop.xlane.xlu0 %1293
          %v1295 = vcvt.f32.s32 %v1294
          %v1296 = vcvt.f32.s32 %v1290
          %v1297 = vshll.u32 %v1296, 16
          %v1298 = vadd.s32 %v1297, %v1295
          %vm1299 = vcmp.lt.s32.totalorder %v1269, %v1270
          %v1300 = vsel %vm1299, %v1269, %v1270
          %v1301 = vand.u32 %v1300, 65535
          %v1302 = vshra.s32 %v1300, 16
          %v1303 = vcvt.s32.f32 %v1301
          %v1304 = vcvt.s32.f32 %v1302
          %1305 = vmin.xlane.f32.xlu0 %v1304
          %v1306 = vpop.xlane.xlu0 %1305
          %vm1307 = vcmp.eq.f32.partialorder %v1304, %v1306
          %v1308 = vsel %vm1307, %v1303, inf
          %1309 = vmin.xlane.f32.xlu0 %v1308
          %v1310 = vpop.xlane.xlu0 %1309
          %v1311 = vcvt.f32.s32 %v1310
          %v1312 = vcvt.f32.s32 %v1306
          %v1313 = vshll.u32 %v1312, 16
          %v1314 = vadd.s32 %v1313, %v1311
          %vm1315 = vcmp.lt.s32.totalorder %v1271, %v1272
          %v1316 = vsel %vm1315, %v1271, %v1272
          %v1317 = vand.u32 %v1316, 65535
          %v1318 = vshra.s32 %v1316, 16
          %v1319 = vcvt.s32.f32 %v1317
          %v1320 = vcvt.s32.f32 %v1318
          %1321 = vmin.xlane.f32.xlu0 %v1320
          %v1322 = vpop.xlane.xlu0 %1321
          %vm1323 = vcmp.eq.f32.partialorder %v1320, %v1322
          %v1324 = vsel %vm1323, %v1319, inf
          %1325 = vmin.xlane.f32.xlu0 %v1324
          %v1326 = vpop.xlane.xlu0 %1325
          %v1327 = vcvt.f32.s32 %v1326
          %v1328 = vcvt.f32.s32 %v1322
          %v1329 = vshll.u32 %v1328, 16
          %v1330 = vadd.s32 %v1329, %v1327
          %vm1331 = vcmp.lt.s32.totalorder %v1273, %v1274
          %v1332 = vsel %vm1331, %v1273, %v1274
          %v1333 = vand.u32 %v1332, 65535
          %v1334 = vshra.s32 %v1332, 16
          %v1335 = vcvt.s32.f32 %v1333
          %v1336 = vcvt.s32.f32 %v1334
          %1337 = vmin.xlane.f32.xlu0 %v1336
          %v1338 = vpop.xlane.xlu0 %1337
          %vm1339 = vcmp.eq.f32.partialorder %v1336, %v1338
          %v1340 = vsel %vm1339, %v1335, inf
          %1341 = vmin.xlane.f32.xlu0 %v1340
          %v1342 = vpop.xlane.xlu0 %1341
          %v1343 = vcvt.f32.s32 %v1342
          %v1344 = vcvt.f32.s32 %v1338
          %v1345 = vshll.u32 %v1344, 16
          %v1346 = vadd.s32 %v1345, %v1343
          %vm1347 = vcmp.lt.s32.totalorder %v1275, %v1276
          %v1348 = vsel %vm1347, %v1275, %v1276
          %v1349 = vand.u32 %v1348, 65535
          %v1350 = vshra.s32 %v1348, 16
          %v1351 = vcvt.s32.f32 %v1349
          %v1352 = vcvt.s32.f32 %v1350
          %1353 = vmin.xlane.f32.xlu0 %v1352
          %v1354 = vpop.xlane.xlu0 %1353
          %vm1355 = vcmp.eq.f32.partialorder %v1352, %v1354
          %v1356 = vsel %vm1355, %v1351, inf
          %1357 = vmin.xlane.f32.xlu0 %v1356
          %v1358 = vpop.xlane.xlu0 %1357
          %v1359 = vcvt.f32.s32 %v1358
          %v1360 = vcvt.f32.s32 %v1354
          %v1361 = vshll.u32 %v1360, 16
          %v1362 = vadd.s32 %v1361, %v1359
          %vm1363 = vcmp.lt.s32.totalorder %v1277, %v1278
          %v1364 = vsel %vm1363, %v1277, %v1278
          %v1365 = vand.u32 %v1364, 65535
          %v1366 = vshra.s32 %v1364, 16
          %v1367 = vcvt.s32.f32 %v1365
          %v1368 = vcvt.s32.f32 %v1366
          %1369 = vmin.xlane.f32.xlu0 %v1368
          %v1370 = vpop.xlane.xlu0 %1369
          %vm1371 = vcmp.eq.f32.partialorder %v1368, %v1370
          %v1372 = vsel %vm1371, %v1367, inf
          %1373 = vmin.xlane.f32.xlu0 %v1372
          %v1374 = vpop.xlane.xlu0 %1373
          %v1375 = vcvt.f32.s32 %v1374
          %v1376 = vcvt.f32.s32 %v1370
          %v1377 = vshll.u32 %v1376, 16
          %v1378 = vadd.s32 %v1377, %v1375
          %vm1379 = vcmp.lt.s32.totalorder %v1279, %v1280
          %v1380 = vsel %vm1379, %v1279, %v1280
          %v1381 = vand.u32 %v1380, 65535
          %v1382 = vshra.s32 %v1380, 16
          %v1383 = vcvt.s32.f32 %v1381
          %v1384 = vcvt.s32.f32 %v1382
          %1385 = vmin.xlane.f32.xlu0 %v1384
          %v1386 = vpop.xlane.xlu0 %1385
          %vm1387 = vcmp.eq.f32.partialorder %v1384, %v1386
          %v1388 = vsel %vm1387, %v1383, inf
          %1389 = vmin.xlane.f32.xlu0 %v1388
          %v1390 = vpop.xlane.xlu0 %1389
          %v1391 = vcvt.f32.s32 %v1390
          %v1392 = vcvt.f32.s32 %v1386
          %v1393 = vshll.u32 %v1392, 16
          %v1394 = vadd.s32 %v1393, %v1391
          %vm1395 = vcmp.lt.s32.totalorder %v1281, %v1282
          %v1396 = vsel %vm1395, %v1281, %v1282
          %v1397 = vand.u32 %v1396, 65535
          %v1398 = vshra.s32 %v1396, 16
          %v1399 = vcvt.s32.f32 %v1397
          %v1400 = vcvt.s32.f32 %v1398
          %1401 = vmin.xlane.f32.xlu0 %v1400
          %v1402 = vpop.xlane.xlu0 %1401
          %vm1403 = vcmp.eq.f32.partialorder %v1400, %v1402
          %v1404 = vsel %vm1403, %v1399, inf
          %1405 = vmin.xlane.f32.xlu0 %v1404
          %v1406 = vpop.xlane.xlu0 %1405
          %v1407 = vcvt.f32.s32 %v1406
          %v1408 = vcvt.f32.s32 %v1402
          %v1409 = vshll.u32 %v1408, 16
          %v1410 = vadd.s32 %v1409, %v1407
          %vm1411 = vcmp.eq.s32.totalorder %v725, %v1298
          %vm1412 = vcmp.eq.s32.totalorder %v726, %v1298
          %vm1413 = vcmp.eq.s32.totalorder %v725, %v1314
          %vm1414 = vcmp.eq.s32.totalorder %v726, %v1314
          %vm1415 = vcmp.eq.s32.totalorder %v725, %v1330
          %vm1416 = vcmp.eq.s32.totalorder %v726, %v1330
          %vm1417 = vcmp.eq.s32.totalorder %v725, %v1346
          %vm1418 = vcmp.eq.s32.totalorder %v726, %v1346
          %vm1419 = vcmp.eq.s32.totalorder %v725, %v1362
          %vm1420 = vcmp.eq.s32.totalorder %v726, %v1362
          %vm1421 = vcmp.eq.s32.totalorder %v725, %v1378
          %vm1422 = vcmp.eq.s32.totalorder %v726, %v1378
          %vm1423 = vcmp.eq.s32.totalorder %v725, %v1394
          %vm1424 = vcmp.eq.s32.totalorder %v726, %v1394
          %vm1425 = vcmp.eq.s32.totalorder %v725, %v1410
          %vm1426 = vcmp.eq.s32.totalorder %v726, %v1410
          %v1427 = vsel %vm1411, %v1229, %v1178
          %v1428 = vsel %vm1412, %v1229, %v1179
          %v1429 = vsel %vm1413, %v1232, %v1180
          %v1430 = vsel %vm1414, %v1232, %v1181
          %v1431 = vsel %vm1415, %v1235, %v1182
          %v1432 = vsel %vm1416, %v1235, %v1183
          %v1433 = vsel %vm1417, %v1238, %v1184
          %v1434 = vsel %vm1418, %v1238, %v1185
          %v1435 = vsel %vm1419, %v1241, %v1186
          %v1436 = vsel %vm1420, %v1241, %v1187
          %v1437 = vsel %vm1421, %v1244, %v1188
          %v1438 = vsel %vm1422, %v1244, %v1189
          %v1439 = vsel %vm1423, %v1247, %v1190
          %v1440 = vsel %vm1424, %v1247, %v1191
          %v1441 = vsel %vm1425, %v1250, %v1192
          %v1442 = vsel %vm1426, %v1250, %v1193
          %v1443 = vsel %vm1411, -inf, %v1194
          %v1444 = vsel %vm1412, -inf, %v1195
          %v1445 = vsel %vm1413, -inf, %v1196
          %v1446 = vsel %vm1414, -inf, %v1197
          %v1447 = vsel %vm1415, -inf, %v1198
          %v1448 = vsel %vm1416, -inf, %v1199
          %v1449 = vsel %vm1417, -inf, %v1200
          %v1450 = vsel %vm1418, -inf, %v1201
          %v1451 = vsel %vm1419, -inf, %v1202
          %v1452 = vsel %vm1420, -inf, %v1203
          %v1453 = vsel %vm1421, -inf, %v1204
          %v1454 = vsel %vm1422, -inf, %v1205
          %v1455 = vsel %vm1423, -inf, %v1206
          %v1456 = vsel %vm1424, -inf, %v1207
          %v1457 = vsel %vm1425, -inf, %v1208
          %v1458 = vsel %vm1426, -inf, %v1209
          %vm1459 = vcmask 23568
          %1460 = vst.msk [vmem:[%s959] sm:$0xff] %vm1459, %v1229
          %1461 = vst.msk [vmem:[%s959 + $0x8] sm:$0xff] %vm1459, %v1232
          %1462 = vst.msk [vmem:[%s959 + $0x10] sm:$0xff] %vm1459, %v1235
          %1463 = vst.msk [vmem:[%s959 + $0x18] sm:$0xff] %vm1459, %v1238
          %1464 = vst.msk [vmem:[%s959 + $0x20] sm:$0xff] %vm1459, %v1241
          %1465 = vst.msk [vmem:[%s959 + $0x28] sm:$0xff] %vm1459, %v1244
          %1466 = vst.msk [vmem:[%s959 + $0x30] sm:$0xff] %vm1459, %v1247
          %1467 = vst.msk [vmem:[%s959 + $0x38] sm:$0xff] %vm1459, %v1250
          %1468 = vst.msk [vmem:[%s969] sm:$0xff] %vm1459, %v1298
          %1469 = vst.msk [vmem:[%s969 + $0x8] sm:$0xff] %vm1459, %v1314
          %1470 = vst.msk [vmem:[%s969 + $0x10] sm:$0xff] %vm1459, %v1330
          %1471 = vst.msk [vmem:[%s969 + $0x18] sm:$0xff] %vm1459, %v1346
          %1472 = vst.msk [vmem:[%s969 + $0x20] sm:$0xff] %vm1459, %v1362
          %1473 = vst.msk [vmem:[%s969 + $0x28] sm:$0xff] %vm1459, %v1378
          %1474 = vst.msk [vmem:[%s969 + $0x30] sm:$0xff] %vm1459, %v1394
          %1475 = vst.msk [vmem:[%s969 + $0x38] sm:$0xff] %vm1459, %v1410
          %v1476 = vmax.f32 %v1443, %v1444
          %1477 = vmax.xlane.f32.xlu0 %v1476
          %v1478 = vpop.xlane.xlu0 %1477
          %v1479 = vmax.f32 %v1445, %v1446
          %1480 = vmax.xlane.f32.xlu0 %v1479
          %v1481 = vpop.xlane.xlu0 %1480
          %v1482 = vmax.f32 %v1447, %v1448
          %1483 = vmax.xlane.f32.xlu0 %v1482
          %v1484 = vpop.xlane.xlu0 %1483
          %v1485 = vmax.f32 %v1449, %v1450
          %1486 = vmax.xlane.f32.xlu0 %v1485
          %v1487 = vpop.xlane.xlu0 %1486
          %v1488 = vmax.f32 %v1451, %v1452
          %1489 = vmax.xlane.f32.xlu0 %v1488
          %v1490 = vpop.xlane.xlu0 %1489
          %v1491 = vmax.f32 %v1453, %v1454
          %1492 = vmax.xlane.f32.xlu0 %v1491
          %v1493 = vpop.xlane.xlu0 %1492
          %v1494 = vmax.f32 %v1455, %v1456
          %1495 = vmax.xlane.f32.xlu0 %v1494
          %v1496 = vpop.xlane.xlu0 %1495
          %v1497 = vmax.f32 %v1457, %v1458
          %1498 = vmax.xlane.f32.xlu0 %v1497
          %v1499 = vpop.xlane.xlu0 %1498
          %vm1500 = vcmp.eq.f32.partialorder %v1443, %v1478
          %vm1501 = vcmp.eq.f32.partialorder %v1444, %v1478
          %vm1502 = vcmp.eq.f32.partialorder %v1445, %v1481
          %vm1503 = vcmp.eq.f32.partialorder %v1446, %v1481
          %vm1504 = vcmp.eq.f32.partialorder %v1447, %v1484
          %vm1505 = vcmp.eq.f32.partialorder %v1448, %v1484
          %vm1506 = vcmp.eq.f32.partialorder %v1449, %v1487
          %vm1507 = vcmp.eq.f32.partialorder %v1450, %v1487
          %vm1508 = vcmp.eq.f32.partialorder %v1451, %v1490
          %vm1509 = vcmp.eq.f32.partialorder %v1452, %v1490
          %vm1510 = vcmp.eq.f32.partialorder %v1453, %v1493
          %vm1511 = vcmp.eq.f32.partialorder %v1454, %v1493
          %vm1512 = vcmp.eq.f32.partialorder %v1455, %v1496
          %vm1513 = vcmp.eq.f32.partialorder %v1456, %v1496
          %vm1514 = vcmp.eq.f32.partialorder %v1457, %v1499
          %vm1515 = vcmp.eq.f32.partialorder %v1458, %v1499
          %v1516 = vsel %vm1500, %v725, 256
          %v1517 = vsel %vm1501, %v726, 256
          %v1518 = vsel %vm1502, %v725, 256
          %v1519 = vsel %vm1503, %v726, 256
          %v1520 = vsel %vm1504, %v725, 256
          %v1521 = vsel %vm1505, %v726, 256
          %v1522 = vsel %vm1506, %v725, 256
          %v1523 = vsel %vm1507, %v726, 256
          %v1524 = vsel %vm1508, %v725, 256
          %v1525 = vsel %vm1509, %v726, 256
          %v1526 = vsel %vm1510, %v725, 256
          %v1527 = vsel %vm1511, %v726, 256
          %v1528 = vsel %vm1512, %v725, 256
          %v1529 = vsel %vm1513, %v726, 256
          %v1530 = vsel %vm1514, %v725, 256
          %v1531 = vsel %vm1515, %v726, 256
          %vm1532 = vcmp.lt.s32.totalorder %v1516, %v1517
          %v1533 = vsel %vm1532, %v1516, %v1517
          %v1534 = vand.u32 %v1533, 65535
          %v1535 = vshra.s32 %v1533, 16
          %v1536 = vcvt.s32.f32 %v1534
          %v1537 = vcvt.s32.f32 %v1535
          %1538 = vmin.xlane.f32.xlu0 %v1537
          %v1539 = vpop.xlane.xlu0 %1538
          %vm1540 = vcmp.eq.f32.partialorder %v1537, %v1539
          %v1541 = vsel %vm1540, %v1536, inf
          %1542 = vmin.xlane.f32.xlu0 %v1541
          %v1543 = vpop.xlane.xlu0 %1542
          %v1544 = vcvt.f32.s32 %v1543
          %v1545 = vcvt.f32.s32 %v1539
          %v1546 = vshll.u32 %v1545, 16
          %v1547 = vadd.s32 %v1546, %v1544
          %vm1548 = vcmp.lt.s32.totalorder %v1518, %v1519
          %v1549 = vsel %vm1548, %v1518, %v1519
          %v1550 = vand.u32 %v1549, 65535
          %v1551 = vshra.s32 %v1549, 16
          %v1552 = vcvt.s32.f32 %v1550
          %v1553 = vcvt.s32.f32 %v1551
          %1554 = vmin.xlane.f32.xlu0 %v1553
          %v1555 = vpop.xlane.xlu0 %1554
          %vm1556 = vcmp.eq.f32.partialorder %v1553, %v1555
          %v1557 = vsel %vm1556, %v1552, inf
          %1558 = vmin.xlane.f32.xlu0 %v1557
          %v1559 = vpop.xlane.xlu0 %1558
          %v1560 = vcvt.f32.s32 %v1559
          %v1561 = vcvt.f32.s32 %v1555
          %v1562 = vshll.u32 %v1561, 16
          %v1563 = vadd.s32 %v1562, %v1560
          %vm1564 = vcmp.lt.s32.totalorder %v1520, %v1521
          %v1565 = vsel %vm1564, %v1520, %v1521
          %v1566 = vand.u32 %v1565, 65535
          %v1567 = vshra.s32 %v1565, 16
          %v1568 = vcvt.s32.f32 %v1566
          %v1569 = vcvt.s32.f32 %v1567
          %1570 = vmin.xlane.f32.xlu0 %v1569
          %v1571 = vpop.xlane.xlu0 %1570
          %vm1572 = vcmp.eq.f32.partialorder %v1569, %v1571
          %v1573 = vsel %vm1572, %v1568, inf
          %1574 = vmin.xlane.f32.xlu0 %v1573
          %v1575 = vpop.xlane.xlu0 %1574
          %v1576 = vcvt.f32.s32 %v1575
          %v1577 = vcvt.f32.s32 %v1571
          %v1578 = vshll.u32 %v1577, 16
          %v1579 = vadd.s32 %v1578, %v1576
          %vm1580 = vcmp.lt.s32.totalorder %v1522, %v1523
          %v1581 = vsel %vm1580, %v1522, %v1523
          %v1582 = vand.u32 %v1581, 65535
          %v1583 = vshra.s32 %v1581, 16
          %v1584 = vcvt.s32.f32 %v1582
          %v1585 = vcvt.s32.f32 %v1583
          %1586 = vmin.xlane.f32.xlu0 %v1585
          %v1587 = vpop.xlane.xlu0 %1586
          %vm1588 = vcmp.eq.f32.partialorder %v1585, %v1587
          %v1589 = vsel %vm1588, %v1584, inf
          %1590 = vmin.xlane.f32.xlu0 %v1589
          %v1591 = vpop.xlane.xlu0 %1590
          %v1592 = vcvt.f32.s32 %v1591
          %v1593 = vcvt.f32.s32 %v1587
          %v1594 = vshll.u32 %v1593, 16
          %v1595 = vadd.s32 %v1594, %v1592
          %vm1596 = vcmp.lt.s32.totalorder %v1524, %v1525
          %v1597 = vsel %vm1596, %v1524, %v1525
          %v1598 = vand.u32 %v1597, 65535
          %v1599 = vshra.s32 %v1597, 16
          %v1600 = vcvt.s32.f32 %v1598
          %v1601 = vcvt.s32.f32 %v1599
          %1602 = vmin.xlane.f32.xlu0 %v1601
          %v1603 = vpop.xlane.xlu0 %1602
          %vm1604 = vcmp.eq.f32.partialorder %v1601, %v1603
          %v1605 = vsel %vm1604, %v1600, inf
          %1606 = vmin.xlane.f32.xlu0 %v1605
          %v1607 = vpop.xlane.xlu0 %1606
          %v1608 = vcvt.f32.s32 %v1607
          %v1609 = vcvt.f32.s32 %v1603
          %v1610 = vshll.u32 %v1609, 16
          %v1611 = vadd.s32 %v1610, %v1608
          %vm1612 = vcmp.lt.s32.totalorder %v1526, %v1527
          %v1613 = vsel %vm1612, %v1526, %v1527
          %v1614 = vand.u32 %v1613, 65535
          %v1615 = vshra.s32 %v1613, 16
          %v1616 = vcvt.s32.f32 %v1614
          %v1617 = vcvt.s32.f32 %v1615
          %1618 = vmin.xlane.f32.xlu0 %v1617
          %v1619 = vpop.xlane.xlu0 %1618
          %vm1620 = vcmp.eq.f32.partialorder %v1617, %v1619
          %v1621 = vsel %vm1620, %v1616, inf
          %1622 = vmin.xlane.f32.xlu0 %v1621
          %v1623 = vpop.xlane.xlu0 %1622
          %v1624 = vcvt.f32.s32 %v1623
          %v1625 = vcvt.f32.s32 %v1619
          %v1626 = vshll.u32 %v1625, 16
          %v1627 = vadd.s32 %v1626, %v1624
          %vm1628 = vcmp.lt.s32.totalorder %v1528, %v1529
          %v1629 = vsel %vm1628, %v1528, %v1529
          %v1630 = vand.u32 %v1629, 65535
          %v1631 = vshra.s32 %v1629, 16
          %v1632 = vcvt.s32.f32 %v1630
          %v1633 = vcvt.s32.f32 %v1631
          %1634 = vmin.xlane.f32.xlu0 %v1633
          %v1635 = vpop.xlane.xlu0 %1634
          %vm1636 = vcmp.eq.f32.partialorder %v1633, %v1635
          %v1637 = vsel %vm1636, %v1632, inf
          %1638 = vmin.xlane.f32.xlu0 %v1637
          %v1639 = vpop.xlane.xlu0 %1638
          %v1640 = vcvt.f32.s32 %v1639
          %v1641 = vcvt.f32.s32 %v1635
          %v1642 = vshll.u32 %v1641, 16
          %v1643 = vadd.s32 %v1642, %v1640
          %vm1644 = vcmp.lt.s32.totalorder %v1530, %v1531
          %v1645 = vsel %vm1644, %v1530, %v1531
          %v1646 = vand.u32 %v1645, 65535
          %v1647 = vshra.s32 %v1645, 16
          %v1648 = vcvt.s32.f32 %v1646
          %v1649 = vcvt.s32.f32 %v1647
          %1650 = vmin.xlane.f32.xlu0 %v1649
          %v1651 = vpop.xlane.xlu0 %1650
          %vm1652 = vcmp.eq.f32.partialorder %v1649, %v1651
          %v1653 = vsel %vm1652, %v1648, inf
          %1654 = vmin.xlane.f32.xlu0 %v1653
          %v1655 = vpop.xlane.xlu0 %1654
          %v1656 = vcvt.f32.s32 %v1655
          %v1657 = vcvt.f32.s32 %v1651
          %v1658 = vshll.u32 %v1657, 16
          %v1659 = vadd.s32 %v1658, %v1656
          %vm1660 = vcmp.eq.s32.totalorder %v725, %v1547
          %vm1661 = vcmp.eq.s32.totalorder %v726, %v1547
          %vm1662 = vcmp.eq.s32.totalorder %v725, %v1563
          %vm1663 = vcmp.eq.s32.totalorder %v726, %v1563
          %vm1664 = vcmp.eq.s32.totalorder %v725, %v1579
          %vm1665 = vcmp.eq.s32.totalorder %v726, %v1579
          %vm1666 = vcmp.eq.s32.totalorder %v725, %v1595
          %vm1667 = vcmp.eq.s32.totalorder %v726, %v1595
          %vm1668 = vcmp.eq.s32.totalorder %v725, %v1611
          %vm1669 = vcmp.eq.s32.totalorder %v726, %v1611
          %vm1670 = vcmp.eq.s32.totalorder %v725, %v1627
          %vm1671 = vcmp.eq.s32.totalorder %v726, %v1627
          %vm1672 = vcmp.eq.s32.totalorder %v725, %v1643
          %vm1673 = vcmp.eq.s32.totalorder %v726, %v1643
          %vm1674 = vcmp.eq.s32.totalorder %v725, %v1659
          %vm1675 = vcmp.eq.s32.totalorder %v726, %v1659
          %v1676 = vsel %vm1660, %v1478, %v1427
          %v1677 = vsel %vm1661, %v1478, %v1428
          %v1678 = vsel %vm1662, %v1481, %v1429
          %v1679 = vsel %vm1663, %v1481, %v1430
          %v1680 = vsel %vm1664, %v1484, %v1431
          %v1681 = vsel %vm1665, %v1484, %v1432
          %v1682 = vsel %vm1666, %v1487, %v1433
          %v1683 = vsel %vm1667, %v1487, %v1434
          %v1684 = vsel %vm1668, %v1490, %v1435
          %v1685 = vsel %vm1669, %v1490, %v1436
          %v1686 = vsel %vm1670, %v1493, %v1437
          %v1687 = vsel %vm1671, %v1493, %v1438
          %v1688 = vsel %vm1672, %v1496, %v1439
          %v1689 = vsel %vm1673, %v1496, %v1440
          %v1690 = vsel %vm1674, %v1499, %v1441
          %v1691 = vsel %vm1675, %v1499, %v1442
          %vm1692 = vcmask 31768
          %1693 = vst.msk [vmem:[%s959] sm:$0xff] %vm1692, %v1478
          %1694 = vst.msk [vmem:[%s959 + $0x8] sm:$0xff] %vm1692, %v1481
          %1695 = vst.msk [vmem:[%s959 + $0x10] sm:$0xff] %vm1692, %v1484
          %1696 = vst.msk [vmem:[%s959 + $0x18] sm:$0xff] %vm1692, %v1487
          %1697 = vst.msk [vmem:[%s959 + $0x20] sm:$0xff] %vm1692, %v1490
          %1698 = vst.msk [vmem:[%s959 + $0x28] sm:$0xff] %vm1692, %v1493
          %1699 = vst.msk [vmem:[%s959 + $0x30] sm:$0xff] %vm1692, %v1496
          %1700 = vst.msk [vmem:[%s959 + $0x38] sm:$0xff] %vm1692, %v1499
          %1701 = vst.msk [vmem:[%s969] sm:$0xff] %vm1692, %v1547
          %1702 = vst.msk [vmem:[%s969 + $0x8] sm:$0xff] %vm1692, %v1563
          %1703 = vst.msk [vmem:[%s969 + $0x10] sm:$0xff] %vm1692, %v1579
          %1704 = vst.msk [vmem:[%s969 + $0x18] sm:$0xff] %vm1692, %v1595
          %1705 = vst.msk [vmem:[%s969 + $0x20] sm:$0xff] %vm1692, %v1611
          %1706 = vst.msk [vmem:[%s969 + $0x28] sm:$0xff] %vm1692, %v1627
          %1707 = vst.msk [vmem:[%s969 + $0x30] sm:$0xff] %vm1692, %v1643
          %1708 = vst.msk [vmem:[%s969 + $0x38] sm:$0xff] %vm1692, %v1659
          %v1709 = vpack.c.bf16 %v1678, %v1676
          %v1710 = vpack.c.bf16 %v1679, %v1677
          %v1711 = vpack.c.bf16 %v1682, %v1680
          %v1712 = vpack.c.bf16 %v1683, %v1681
          %v1713 = vpack.c.bf16 %v1686, %v1684
          %v1714 = vpack.c.bf16 %v1687, %v1685
          %v1715 = vpack.c.bf16 %v1690, %v1688
          %v1716 = vpack.c.bf16 %v1691, %v1689
          %v1717 = vld [vmem:[#allocation7] sm:$0xf]
          %v1718 = vld [vmem:[#allocation7 + $0x4] sm:$0xf]
          %v1719 = vld [vmem:[#allocation7 + $0x8] sm:$0xf]
          %v1720 = vld [vmem:[#allocation7 + $0xc] sm:$0xf]
          %v1721 = vld [vmem:[#allocation7 + $0x10] sm:$0xf]
          %v1722 = vld [vmem:[#allocation7 + $0x14] sm:$0xf]
          %v1723 = vld [vmem:[#allocation7 + $0x18] sm:$0xf]
          %v1724 = vld [vmem:[#allocation7 + $0x1c] sm:$0xf]
          %v1725 = vld [vmem:[#allocation7 + $0x20] sm:$0xf]
          %v1726 = vld [vmem:[#allocation7 + $0x24] sm:$0xf]
          %v1727 = vld [vmem:[#allocation7 + $0x28] sm:$0xf]
          %v1728 = vld [vmem:[#allocation7 + $0x2c] sm:$0xf]
          %v1729 = vld [vmem:[#allocation7 + $0x30] sm:$0xf]
          %v1730 = vld [vmem:[#allocation7 + $0x34] sm:$0xf]
          %v1731 = vld [vmem:[#allocation7 + $0x38] sm:$0xf]
          %v1732 = vld [vmem:[#allocation7 + $0x3c] sm:$0xf]
          %v1733 = vld [vmem:[#allocation7 + $0x40] sm:$0xf]
          %v1734 = vld [vmem:[#allocation7 + $0x44] sm:$0xf]
          %v1735 = vld [vmem:[#allocation7 + $0x48] sm:$0xf]
          %v1736 = vld [vmem:[#allocation7 + $0x4c] sm:$0xf]
          %v1737 = vld [vmem:[#allocation7 + $0x50] sm:$0xf]
          %v1738 = vld [vmem:[#allocation7 + $0x54] sm:$0xf]
          %v1739 = vld [vmem:[#allocation7 + $0x58] sm:$0xf]
          %v1740 = vld [vmem:[#allocation7 + $0x5c] sm:$0xf]
          %v1741 = vld [vmem:[#allocation7 + $0x60] sm:$0xf]
          %v1742 = vld [vmem:[#allocation7 + $0x64] sm:$0xf]
          %v1743 = vld [vmem:[#allocation7 + $0x68] sm:$0xf]
          %v1744 = vld [vmem:[#allocation7 + $0x6c] sm:$0xf]
          %v1745 = vld [vmem:[#allocation7 + $0x70] sm:$0xf]
          %v1746 = vld [vmem:[#allocation7 + $0x74] sm:$0xf]
          %v1747 = vld [vmem:[#allocation7 + $0x78] sm:$0xf]
          %v1748 = vld [vmem:[#allocation7 + $0x7c] sm:$0xf]
          %v1749 = vld [vmem:[%s4] sm:$0x1]
          %v1751 = vlaneseq
          %v1752 = vshrl.u32 %v1751, 7
          %v1753 = vsub.s32 0, %v1752
          %v1754 = vrot.slane %v1749, %v1753
          %v1788 = vunpack.c.l.b16 %v1717
          %v1789 = vunpack.c.l.b16 %v1718
          %v1790 = vunpack.c.l.b16 %v1719
          %v1791 = vunpack.c.l.b16 %v1720
          %v1792 = vunpack.c.l.b16 %v1721
          %v1793 = vunpack.c.l.b16 %v1722
          %v1794 = vunpack.c.l.b16 %v1723
          %v1795 = vunpack.c.l.b16 %v1724
          %v1796 = vunpack.c.l.b16 %v1725
          %v1797 = vunpack.c.l.b16 %v1726
          %v1798 = vunpack.c.l.b16 %v1727
          %v1799 = vunpack.c.l.b16 %v1728
          %v1800 = vunpack.c.l.b16 %v1729
          %v1801 = vunpack.c.l.b16 %v1730
          %v1802 = vunpack.c.l.b16 %v1731
          %v1803 = vunpack.c.l.b16 %v1732
          %v1804 = vunpack.c.l.b16 %v1733
          %v1805 = vunpack.c.l.b16 %v1734
          %v1806 = vunpack.c.l.b16 %v1735
          %v1807 = vunpack.c.l.b16 %v1736
          %v1808 = vunpack.c.l.b16 %v1737
          %v1809 = vunpack.c.l.b16 %v1738
          %v1810 = vunpack.c.l.b16 %v1739
          %v1811 = vunpack.c.l.b16 %v1740
          %v1812 = vunpack.c.l.b16 %v1741
          %v1813 = vunpack.c.l.b16 %v1742
          %v1814 = vunpack.c.l.b16 %v1743
          %v1815 = vunpack.c.l.b16 %v1744
          %v1816 = vunpack.c.l.b16 %v1745
          %v1817 = vunpack.c.l.b16 %v1746
          %v1818 = vunpack.c.l.b16 %v1747
          %v1819 = vunpack.c.l.b16 %v1748
          %v1820 = vpack.c.b16 %v1789, %v1788
          %v1821 = vpack.c.b16 %v1791, %v1790
          %v1822 = vpack.c.b16 %v1793, %v1792
          %v1823 = vpack.c.b16 %v1795, %v1794
          %v1824 = vpack.c.b16 %v1797, %v1796
          %v1825 = vpack.c.b16 %v1799, %v1798
          %v1826 = vpack.c.b16 %v1801, %v1800
          %v1827 = vpack.c.b16 %v1803, %v1802
          %v1828 = vpack.c.b16 %v1805, %v1804
          %v1829 = vpack.c.b16 %v1807, %v1806
          %v1830 = vpack.c.b16 %v1809, %v1808
          %v1831 = vpack.c.b16 %v1811, %v1810
          %v1832 = vpack.c.b16 %v1813, %v1812
          %v1833 = vpack.c.b16 %v1815, %v1814
          %v1834 = vpack.c.b16 %v1817, %v1816
          %v1835 = vpack.c.b16 %v1819, %v1818
          %1852 = vmatprep.subr.bf16.mxu0 0
          %1853 = vmatpush1.bf16.msra.mxu0 %v1827
          %1854 = vmatprep.subr.bf16.mxu0 0
          %1855 = vmatpush1.bf16.msra.mxu0 %v1826
          %1856 = vmatprep.subr.bf16.mxu0 0
          %1857 = vmatpush1.bf16.msra.mxu0 %v1825
          %1858 = vmatprep.subr.bf16.mxu0 0
          %1859 = vmatpush1.bf16.msra.mxu0 %v1824
          %1860 = vmatprep.subr.bf16.mxu0 0
          %1861 = vmatpush1.bf16.msra.mxu0 %v1823
          %1862 = vmatprep.subr.bf16.mxu0 0
          %1863 = vmatpush1.bf16.msra.mxu0 %v1822
          %1864 = vmatprep.subr.bf16.mxu0 0
          %1865 = vmatpush1.bf16.msra.mxu0 %v1821
          %1866 = vmatprep.subr.bf16.mxu0 0
          %1867 = vmatpush1.bf16.msra.mxu0 %v1820
          %1868 = vmatprep.subr.bf16.mxu0 0
          %1869 = vmatpush2.bf16.msra.mxu0 %v1835
          %1870 = vmatprep.subr.bf16.mxu0 0
          %1871 = vmatpush2.bf16.msra.mxu0 %v1834
          %1872 = vmatprep.subr.bf16.mxu0 0
          %1873 = vmatpush2.bf16.msra.mxu0 %v1833
          %1874 = vmatprep.subr.bf16.mxu0 0
          %1875 = vmatpush2.bf16.msra.mxu0 %v1832
          %1876 = vmatprep.subr.bf16.mxu0 0
          %1877 = vmatpush2.bf16.msra.mxu0 %v1831
          %1878 = vmatprep.subr.bf16.mxu0 0
          %1879 = vmatpush2.bf16.msra.mxu0 %v1830
          %1880 = vmatprep.subr.bf16.mxu0 0
          %1881 = vmatpush2.bf16.msra.mxu0 %v1829
          %1882 = vmatprep.subr.bf16.mxu0 0
          %1883 = vmatpush2.bf16.msra.mxu0 %v1828
          %1884 = vmatprep.mubr.bf16.mxu0 %v1710
          %1885 = vmatmul.mubr.bf16.gmra.mxu0 %v1709
          %v1886 = vpop.f32.mrf.mxu0
          %v1887 = vadd.f32 %v1754, %v1886
          %v1888 = vpop.f32.mrf.mxu0
          %v1889 = vpop.f32.mrf.mxu0
          %v1890 = vadd.f32 %v1754, %v1889
          %v1891 = vpop.f32.mrf.mxu0
          %1892 = vmatprep.mubr.bf16.mxu0 %v1712
          %1893 = vmatmul.mubr.bf16.gmra.mxu0 %v1711
          %v1894 = vpop.f32.mrf.mxu0
          %v1895 = vadd.f32 %v1754, %v1894
          %v1896 = vpop.f32.mrf.mxu0
          %v1897 = vpop.f32.mrf.mxu0
          %v1898 = vadd.f32 %v1754, %v1897
          %v1899 = vpop.f32.mrf.mxu0
          %1900 = vmatprep.mubr.bf16.mxu0 %v1714
          %1901 = vmatmul.mubr.bf16.gmra.mxu0 %v1713
          %v1902 = vpop.f32.mrf.mxu0
          %v1903 = vadd.f32 %v1754, %v1902
          %v1904 = vpop.f32.mrf.mxu0
          %v1905 = vpop.f32.mrf.mxu0
          %v1906 = vadd.f32 %v1754, %v1905
          %v1907 = vpop.f32.mrf.mxu0
          %1908 = vmatprep.mubr.bf16.mxu0 %v1716
          %1909 = vmatmul.mubr.bf16.gmra.mxu0 %v1715
          %v1910 = vpop.f32.mrf.mxu0
          %v1911 = vadd.f32 %v1754, %v1910
          %v1912 = vpop.f32.mrf.mxu0
          %v1913 = vpop.f32.mrf.mxu0
          %v1914 = vadd.f32 %v1754, %v1913
          %v1915 = vpop.f32.mrf.mxu0
          %1916 = vdwg.mxu0
          %s1917 = scalar_lea.vmem %s326, %s362 [#allocation8]
          %1918 = vst [vmem:[%s1917] sm:$0xff] %v1887
          %1919 = vst [vmem:[%s1917 + $0x8] sm:$0xff] %v1890
          %1920 = vst [vmem:[%s1917 + $0x10] sm:$0xff] %v1895
          %1921 = vst [vmem:[%s1917 + $0x18] sm:$0xff] %v1898
          %1922 = vst [vmem:[%s1917 + $0x20] sm:$0xff] %v1903
          %1923 = vst [vmem:[%s1917 + $0x28] sm:$0xff] %v1906
          %1924 = vst [vmem:[%s1917 + $0x30] sm:$0xff] %v1911
          %1925 = vst [vmem:[%s1917 + $0x38] sm:$0xff] %v1914
        $region57: #{tpu_custom_call.1} parent=39 // loop_footer
          %s361 = sadd.s32 1, %s357
        $region58: #{tpu_custom_call.1} parent=39 // loop_footer_branch
          %356 = sbr.rel target = $region54
        $region59: #{tpu_custom_call.1} parent=39 // loop_exit
          _
        %s1926 = sand.u32 %s144, 1
        %s1927 = scalar_lea.sflag [#allocation4], %s1926
        %s1928 = sand.u32 %s144, 1
        %s1929 = smul.addr %s1928, 128
        %s1930 = scalar_lea.vmem [#allocation8], %s1929
        %s1931 = smul.u32 16, %s26
        %p1932 = scmp.lt.s32.totalorder %s1931, 63
        %s1933 = scalar_select %p1932, %s1931, 63
        %s1934 = smul.addr %s1933, 8
        %s1935 = scalar_lea.vmem %s6, %s1934
        %s1936 = smul.u32 16, %s26
        %p1937 = scmp.lt.s32.totalorder %s1936, 63
        %s1938 = scalar_select %p1937, %s1936, 63
        %s1939 = smul.addr %s1938, 8
        %s1940 = scalar_lea.vmem %s7, %s1939
        // Predicated region
        $region60: #{tpu_custom_call.1} parent=39 // pred_check
          %p1941 = pneg %p154
        $region61: #{tpu_custom_call.1} parent=39 // pred_check_branch
          %1943 = sbr.rel (%p1941) target = $region63
        $region62: #{tpu_custom_call.1} parent=39 // pred_region
          %s1944 = smul.u32 16, %s26
          %s1946 = ssub.s32 2048, 2048
          %1947 = vsyncadd %s1927, %s1946
          %s1948 = smul.addr %s1944, 128
          %s1949 = scalar_lea.hbm %s5, %s1948
          %s1950 = sshll.u32 %s1930, 4
          %s1951 = int_to_ptr.vmem [resolvable:$true] %s1950
          %1956 = dma.vmem_to_hbm [thread:$0]  %s1951, 2048, %s1949, %s1927, 128, 128, 8
        $region63: #{tpu_custom_call.1} parent=39 // pred_fallthru
          _
        // Predicated region
        $region64: #{tpu_custom_call.1} parent=39 // pred_check
          %p1957 = pneg %p180
        $region65: #{tpu_custom_call.1} parent=39 // pred_check_branch
          %1959 = sbr.rel (%p1957) target = $region67
        $region66: #{tpu_custom_call.1} parent=39 // pred_region
          %s1960 = smul.u32 16, %s26
        $region67: #{tpu_custom_call.1} parent=39 // pred_fallthru
          _
        // Predicated region
        $region68: #{tpu_custom_call.1} parent=39 // pred_check
          %p1961 = pneg %p206
        $region69: #{tpu_custom_call.1} parent=39 // pred_check_branch
          %1963 = sbr.rel (%p1961) target = $region71
        $region70: #{tpu_custom_call.1} parent=39 // pred_region
          %s1964 = smul.u32 16, %s26
        $region71: #{tpu_custom_call.1} parent=39 // pred_fallthru
          _
      $region40: #{tpu_custom_call.1} parent=5 // pred_fallthru
        _
      %p1965 = scmp.le.s32.totalorder 2, %s21
      // Predicated region
      $region72: #{tpu_custom_call.1} parent=5 // pred_check
        %p1966 = pneg %p1965
      $region73: #{tpu_custom_call.1} parent=5 // pred_check_branch
        %1968 = sbr.rel (%p1966) target = $region75
      $region74: #{tpu_custom_call.1} parent=5 // pred_region
        %s1969 = ssub.s32 %s21, 2
        // Predicated region
        $region76: #{tpu_custom_call.1} parent=74 // pred_check
          %p1970 = pneg %p160
        $region77: #{tpu_custom_call.1} parent=74 // pred_check_branch
          %1972 = sbr.rel (%p1970) target = $region79
        $region78: #{tpu_custom_call.1} parent=74 // pred_region
          %s1973 = sand.u32 %s145, 1
          %s1974 = scalar_lea.sflag [#allocation4], %s1973
          %s1975 = sand.u32 %s145, 1
          %s1976 = smul.addr %s1975, 128
          %s1977 = scalar_lea.vmem [#allocation8], %s1976
          %1978 = dma.done %s1974, 2048
        $region79: #{tpu_custom_call.1} parent=74 // pred_fallthru
          _
        // Predicated region
        $region80: #{tpu_custom_call.1} parent=74 // pred_check
          %p1979 = pneg %p186
        $region81: #{tpu_custom_call.1} parent=74 // pred_check_branch
          %1981 = sbr.rel (%p1979) target = $region83
        $region82: #{tpu_custom_call.1} parent=74 // pred_region
          %s1982 = smul.u32 16, %s27
          %p1983 = scmp.lt.s32.totalorder %s1982, 63
          %s1984 = scalar_select %p1983, %s1982, 63
          %s1985 = smul.addr %s1984, 8
          %s1986 = scalar_lea.vmem %s6, %s1985
        $region83: #{tpu_custom_call.1} parent=74 // pred_fallthru
          _
        // Predicated region
        $region84: #{tpu_custom_call.1} parent=74 // pred_check
          %p1987 = pneg %p212
        $region85: #{tpu_custom_call.1} parent=74 // pred_check_branch
          %1989 = sbr.rel (%p1987) target = $region87
        $region86: #{tpu_custom_call.1} parent=74 // pred_region
          %s1990 = smul.u32 16, %s27
          %p1991 = scmp.lt.s32.totalorder %s1990, 63
          %s1992 = scalar_select %p1991, %s1990, 63
          %s1993 = smul.addr %s1992, 8
          %s1994 = scalar_lea.vmem %s7, %s1993
        $region87: #{tpu_custom_call.1} parent=74 // pred_fallthru
          _
      $region75: #{tpu_custom_call.1} parent=5 // pred_fallthru
        _
    $region6: #{tpu_custom_call.1} parent=1 // loop_footer
      %s25 = sadd.s32 1, %s21
    $region7: #{tpu_custom_call.1} parent=1 // loop_footer_branch
      %20 = sbr.rel target = $region3
    $region8: #{tpu_custom_call.1} parent=1 // loop_exit
      _
    %1995 = vsyncpa [#allocation3], 1
    %s1996 = scalar_lea.sflag [#allocation3], 1
    %1997 = vsyncpa %s1996, 1
    %1998 = vsyncpa [#allocation6], 1
    %1999 = vsyncpa [#allocation4], 1
    %s2000 = scalar_lea.sflag [#allocation4], 1
    %2001 = vsyncpa %s2000, 1

</llo_original>
